<compile_context>
chip_gen: v6e
topology: v6e:2x2x1
jax: 0.10.0
libtpu: 0.0.40
codegen_flags: <defaults>
</compile_context>

<pallas_src>
import functools
import math

import jax
import jax.numpy as jnp
from jax.experimental import pallas as pl
from jax.experimental.pallas import tpu as pltpu

_D_OUT_PAD = 128   # lane-aligned width for the second matmul (only col 0 real)


def _network_kernel(x_ref, w1_ref, b1_ref, w2_ref, b2_ref, o_ref):
    # x_ref : (tm, d_in)        input dtype (cast to compute dtype below)
    # w1_ref: (d_in, d_hidden)  compute dtype, resident
    # b1_ref: (1, d_hidden)     f32, resident
    # w2_ref: (d_hidden, 128)   compute dtype, resident (column 0 real, rest 0)
    # b2_ref: (1, 1)            f32, resident
    # o_ref : (tm, 1)           output dtype
    x = x_ref[...]
    if x.dtype != w1_ref.dtype:
        x = x.astype(w1_ref.dtype)      # in-kernel cast: no extra HBM pass over x
    h = jnp.dot(x, w1_ref[...], preferred_element_type=jnp.float32)
    h = h + b1_ref[...]
    h = pl.reciprocal(1.0 + jnp.exp(-h), approx=True)        # sigmoid (EUP)
    # Second linear: only column 0 of the padded W2 is meaningful.
    # (h is quantized to the compute dtype here; covered by the test tolerance.)
    y = jnp.dot(h.astype(w2_ref.dtype), w2_ref[...],
                preferred_element_type=jnp.float32)
    y = y[:, 0:1] + b2_ref[...]
    y = pl.reciprocal(1.0 + jnp.exp(-y), approx=True)        # sigmoid (EUP)
    o_ref[...] = y.astype(o_ref.dtype)


def _round_up(x, m):
    return ((x + m - 1) // m) * m


def network_forward(x, w1, b1, w2, b2, *, tm=None, compute_dtype=jnp.bfloat16):
    """x: (..., d_in). w1: (d_in, d_hidden), b1: (d_hidden,),
    w2: (d_hidden, d_out), b2: (d_out,) -- PyTorch Linear weights pre-transposed.
    Matmuls run in `compute_dtype` (None => weights' native dtype) with f32
    accumulation.  Returns (..., d_out) in x's dtype."""
    *lead, d_in = x.shape
    d_hidden = w1.shape[1]
    d_out = w2.shape[1]
    assert d_out == 1, "kernel specialized for the module's Linear(256, 1) head"
    M = int(math.prod(lead)) if lead else 1
    out_dtype = x.dtype

    w_dtype = jnp.dtype(compute_dtype) if compute_dtype is not None else w1.dtype

    # Pad W2 to a lane-aligned width for the MXU; only column 0 is real.
    w2p = jnp.zeros((d_hidden, _D_OUT_PAD), w_dtype).at[:, :d_out].set(
        w2.astype(w_dtype))
    w1c = w1.astype(w_dtype)
    b1_2 = b1.astype(jnp.float32).reshape(1, d_hidden)
    b2_2 = b2.astype(jnp.float32).reshape(1, 1)

    x2 = x.reshape(M, d_in)   # NOTE: no dtype cast here -- done in-kernel.

    # Row tile: big (HBM-bound => amortize per-step pipeline overhead),
    # sublane/packing aligned (16 covers f32 and bf16 tiles), and split so the
    # grid has >= 2 steps (both v7x TensorCores share the "parallel" axis).
    if tm is None:
        tm = 1024
    tm = max(1, min(int(tm), M))
    if tm < M:
        tm = _round_up(tm, 16)
    if M >= 32 and pl.cdiv(M, tm) < 2:
        tm = _round_up(pl.cdiv(M, 2), 16)
    grid = (pl.cdiv(M, tm),)
    # If M % tm != 0, the last x block reads Pallas-padded rows; rows are
    # independent and the out-of-bounds output rows are masked on writeback,
    # so the valid rows remain correct.

    in_itemsize = jnp.dtype(x2.dtype).itemsize
    w_itemsize = jnp.dtype(w_dtype).itemsize
    out_itemsize = jnp.dtype(out_dtype).itemsize
    vmem_bytes = (2 * tm * d_in * in_itemsize           # x tile, double-buffered
                  + tm * d_in * w_itemsize              # in-kernel cast copy
                  + d_in * d_hidden * w_itemsize        # W1 (resident)
                  + d_hidden * _D_OUT_PAD * w_itemsize  # W2 padded (resident)
                  + tm * d_hidden * 4                   # h (f32)
                  + tm * _D_OUT_PAD * 4                 # 2nd matmul result (f32)
                  + 2 * tm * out_itemsize               # out tile, double-buffered
                  + (2 << 20))                          # slack
    # v7x guardrail: 64 MiB VMEM per TensorCore -> keep scoped limit <= 48 MiB.
    vmem_limit = int(min(max(3 * vmem_bytes // 2, 16 << 20), 48 << 20))

    cost = pl.CostEstimate(
        flops=2 * M * d_in * d_hidden + 2 * M * d_hidden * _D_OUT_PAD,
        transcendentals=M * (d_hidden + 1),
        bytes_accessed=(M * d_in * in_itemsize
                        + d_in * d_hidden * w_itemsize
                        + d_hidden * _D_OUT_PAD * w_itemsize
                        + M * out_itemsize),
    )

    resident = pl.Buffered(1)   # grid-invariant operands: no double buffer
    out = pl.pallas_call(
        _network_kernel,
        out_shape=jax.ShapeDtypeStruct((M, 1), out_dtype),
        grid_spec=pltpu.PrefetchScalarGridSpec(
            num_scalar_prefetch=0,
            grid=grid,
            in_specs=[
                pl.BlockSpec((tm, d_in), lambda i: (i, 0)),              # x tile
                pl.BlockSpec((d_in, d_hidden), lambda i: (0, 0),
                             pipeline_mode=resident),                    # W1
                pl.BlockSpec((1, d_hidden), lambda i: (0, 0),
                             pipeline_mode=resident),                    # b1
                pl.BlockSpec((d_hidden, _D_OUT_PAD), lambda i: (0, 0),
                             pipeline_mode=resident),                    # W2 (padded)
                pl.BlockSpec((1, 1), lambda i: (0, 0),
                             pipeline_mode=resident),                    # b2
            ],
            out_specs=pl.BlockSpec((tm, 1), lambda i: (i, 0)),
        ),
        compiler_params=pltpu.CompilerParams(
            dimension_semantics=("parallel",),
            vmem_limit_bytes=vmem_limit,
        ),
        cost_estimate=cost,
    )(x2, w1c, b1_2, w2p, b2_2)

    return out.reshape(*lead, d_out)


def network_ref(x, w1, b1, w2, b2):
    h = jax.nn.sigmoid(jnp.einsum("...d,dh->...h", x, w1) + b1)
    return jax.nn.sigmoid(jnp.einsum("...h,ho->...o", h, w2) + b2)


# TODO(synk): nn.Softmax(dim=1) is declared in the module but never used in
# forward(), so it is intentionally not implemented in the kernel.

if __name__ == "__main__":
    d_in, d_hidden, d_out = 1024, 256, 1     # shapes fixed by the module
    batch = 512                              # several row tiles after the >=2-step split

    key = jax.random.PRNGKey(0)
    k_x, k_w1, k_b1, k_w2, k_b2 = jax.random.split(key, 5)

    x = jax.random.normal(k_x, (batch, d_in), dtype=jnp.float32)
    # PyTorch Linear weights are (out, in); stored here pre-transposed (in, out).
    w1 = jax.random.normal(k_w1, (d_in, d_hidden), dtype=jnp.float32) / math.sqrt(d_in)
    b1 = jax.random.normal(k_b1, (d_hidden,), dtype=jnp.float32) * 0.1
    w2 = jax.random.normal(k_w2, (d_hidden, d_out), dtype=jnp.float32) / math.sqrt(d_hidden)
    b2 = jax.random.normal(k_b2, (d_out,), dtype=jnp.float32) * 0.1

    ref = network_ref(x, w1, b1, w2, b2)

    # jit the wrapper so the weight pad/cast/reshape is hoisted out of the hot path.
    fwd_bf16 = jax.jit(network_forward)  # default: bf16 MXU compute, f32 accumulate
    fwd_f32 = jax.jit(functools.partial(network_forward, compute_dtype=jnp.float32))

    out_bf16 = jax.block_until_ready(fwd_bf16(x, w1, b1, w2, b2))
    assert out_bf16.shape == (batch, d_out)
    assert jnp.allclose(out_bf16, ref, atol=3e-2, rtol=3e-2), "bf16 kernel mismatch vs reference"

    out_f32 = jax.block_until_ready(fwd_f32(x, w1, b1, w2, b2))
    assert out_f32.shape == (batch, d_out)
    assert jnp.allclose(out_f32, ref, atol=5e-3, rtol=5e-3), "f32 kernel mismatch vs reference"

    print("KERNEL_OK")
</pallas_src>

<mosaic_0001>
module attributes {stable_mosaic.version = 11 : i64} {
  func.func @_network_kernel(%arg0: i32, %arg1: memref<256x1024xf32, #tpu.memory_space<vmem>>, %arg2: memref<1024x256xbf16, #tpu.memory_space<vmem>>, %arg3: memref<1x256xf32, #tpu.memory_space<vmem>>, %arg4: memref<256x128xbf16, #tpu.memory_space<vmem>>, %arg5: memref<1x1xf32, #tpu.memory_space<vmem>>, %arg6: memref<256x1xf32, #tpu.memory_space<vmem>>) attributes {dimension_semantics = [#tpu.dimension_semantics<parallel>], iteration_bounds = array<i64: 2>, scalar_prefetch = 0 : i64, scratch_operands = 0 : i64, tpu.core_type = #tpu.core_type<tc>, window_params = [{transform_indices = @transform_0, window_bounds = array<i64: 256, 1024>}, {pipeline_mode = #tpu.pipeline_mode<synchronous>, transform_indices = @transform_1, window_bounds = array<i64: 1024, 256>}, {pipeline_mode = #tpu.pipeline_mode<synchronous>, transform_indices = @transform_2, window_bounds = array<i64: 1, 256>}, {pipeline_mode = #tpu.pipeline_mode<synchronous>, transform_indices = @transform_3, window_bounds = array<i64: 256, 128>}, {pipeline_mode = #tpu.pipeline_mode<synchronous>, transform_indices = @transform_4, window_bounds = array<i64: 1, 1>}, {transform_indices = @transform_5, window_bounds = array<i64: 256, 1>}]} {
    %c0 = arith.constant 0 : index
    %c0_0 = arith.constant 0 : index
    %0 = vector.load %arg1[%c0, %c0_0] : memref<256x1024xf32, #tpu.memory_space<vmem>>, vector<256x1024xf32>
    %1 = arith.truncf %0 : vector<256x1024xf32> to vector<256x1024xbf16>
    %c0_1 = arith.constant 0 : index
    %c0_2 = arith.constant 0 : index
    %2 = vector.load %arg2[%c0_1, %c0_2] : memref<1024x256xbf16, #tpu.memory_space<vmem>>, vector<1024x256xbf16>
    %cst = arith.constant dense<0.000000e+00> : vector<256x256xf32>
    %3 = tpu.matmul %1, %2, %cst {dimension_numbers = #tpu.dot_dimension_numbers<[1], [0], [0], [1], [0, 0, 1, 1], [], []>} : vector<256x1024xbf16>, vector<1024x256xbf16>, vector<256x256xf32> -> vector<256x256xf32>
    %c0_3 = arith.constant 0 : index
    %c0_4 = arith.constant 0 : index
    %4 = vector.load %arg3[%c0_3, %c0_4] : memref<1x256xf32, #tpu.memory_space<vmem>>, vector<1x256xf32>
    %5 = vector.broadcast %4 : vector<1x256xf32> to vector<256x256xf32>
    %6 = arith.addf %3, %5 : vector<256x256xf32>
    %cst_5 = arith.constant 0.000000e+00 : f32
    %7 = vector.broadcast %cst_5 : f32 to vector<256x256xf32>
    %8 = arith.subf %7, %6 : vector<256x256xf32>
    %9 = math.exp %8 : vector<256x256xf32>
    %cst_6 = arith.constant 1.000000e+00 : f32
    %10 = vector.broadcast %cst_6 : f32 to vector<256x256xf32>
    %11 = arith.addf %10, %9 : vector<256x256xf32>
    %12 = tpu.reciprocal %11 {approx = true} : vector<256x256xf32> -> vector<256x256xf32>
    %13 = arith.truncf %12 : vector<256x256xf32> to vector<256x256xbf16>
    %c0_7 = arith.constant 0 : index
    %c0_8 = arith.constant 0 : index
    %14 = vector.load %arg4[%c0_7, %c0_8] : memref<256x128xbf16, #tpu.memory_space<vmem>>, vector<256x128xbf16>
    %cst_9 = arith.constant dense<0.000000e+00> : vector<256x128xf32>
    %15 = tpu.matmul %13, %14, %cst_9 {dimension_numbers = #tpu.dot_dimension_numbers<[1], [0], [0], [1], [0, 0, 1, 1], [], []>} : vector<256x256xbf16>, vector<256x128xbf16>, vector<256x128xf32> -> vector<256x128xf32>
    %16 = vector.extract_strided_slice %15 {offsets = [0, 0], sizes = [256, 1], strides = [1, 1]} : vector<256x128xf32> to vector<256x1xf32>
    %c0_10 = arith.constant 0 : index
    %c0_11 = arith.constant 0 : index
    %17 = vector.load %arg5[%c0_10, %c0_11] : memref<1x1xf32, #tpu.memory_space<vmem>>, vector<1x1xf32>
    %18 = vector.broadcast %17 : vector<1x1xf32> to vector<256x1xf32>
    %19 = arith.addf %16, %18 : vector<256x1xf32>
    %cst_12 = arith.constant 0.000000e+00 : f32
    %20 = vector.broadcast %cst_12 : f32 to vector<256x1xf32>
    %21 = arith.subf %20, %19 : vector<256x1xf32>
    %22 = math.exp %21 : vector<256x1xf32>
    %cst_13 = arith.constant 1.000000e+00 : f32
    %23 = vector.broadcast %cst_13 : f32 to vector<256x1xf32>
    %24 = arith.addf %23, %22 : vector<256x1xf32>
    %25 = tpu.reciprocal %24 {approx = true} : vector<256x1xf32> -> vector<256x1xf32>
    %c0_14 = arith.constant 0 : index
    %c0_15 = arith.constant 0 : index
    %26 = vector.load %arg6[%c0_14, %c0_15] : memref<256x1xf32, #tpu.memory_space<vmem>>, vector<256x1xf32>
    tpu.vector_store %arg6[%c0_14, %c0_15], %25 {strides = array<i32>} : memref<256x1xf32, #tpu.memory_space<vmem>>, vector<256x1xf32>,
    return
  }
  func.func @transform_0(%arg0: i32) -> (i32, i32) {
    %c0_i32 = arith.constant 0 : i32
    %c0_i32_0 = arith.constant 0 : i32
    return %arg0, %c0_i32 : i32, i32
  }
  func.func @transform_1(%arg0: i32) -> (i32, i32) {
    %c0_i32 = arith.constant 0 : i32
    %c0_i32_0 = arith.constant 0 : i32
    %c0_i32_1 = arith.constant 0 : i32
    return %c0_i32, %c0_i32_0 : i32, i32
  }
  func.func @transform_2(%arg0: i32) -> (i32, i32) {
    %c0_i32 = arith.constant 0 : i32
    %c0_i32_0 = arith.constant 0 : i32
    %c0_i32_1 = arith.constant 0 : i32
    return %c0_i32, %c0_i32_0 : i32, i32
  }
  func.func @transform_3(%arg0: i32) -> (i32, i32) {
    %c0_i32 = arith.constant 0 : i32
    %c0_i32_0 = arith.constant 0 : i32
    %c0_i32_1 = arith.constant 0 : i32
    return %c0_i32, %c0_i32_0 : i32, i32
  }
  func.func @transform_4(%arg0: i32) -> (i32, i32) {
    %c0_i32 = arith.constant 0 : i32
    %c0_i32_0 = arith.constant 0 : i32
    %c0_i32_1 = arith.constant 0 : i32
    return %c0_i32, %c0_i32_0 : i32, i32
  }
  func.func @transform_5(%arg0: i32) -> (i32, i32) {
    %c0_i32 = arith.constant 0 : i32
    %c0_i32_0 = arith.constant 0 : i32
    return %arg0, %c0_i32 : i32, i32
  }
}

</mosaic_0001>

<llo_original>
// kernel: network_forward.1
$region0: #{network_forward.1}
  #allocation0 [shape = 'u32[]', space=smem, size = 0x4, offset = 0x4, fixed_abs, tag = 'smem constant byte address 0x4 - core index']
  #allocation1 [shape = 'u32[144,128]{1,0:T(1,128)}', space=vmem, size = 0x12000, scoped, tag = 'internal scratch']
  #allocation2 [shape = 'f32[1,1]{1,0:T(1,128)S(1)}', space=vmem, size = 0x200, scoped, tag = 'scoped memory for network_forward.1']
  %s0 = inlined_call_operand.hbm [shape: f32[512,1024], index: 0, kind: input, shape index: {}]
  %s1 = inlined_call_operand.vmem [shape: bf16[1024,256], index: 1, kind: input, shape index: {}]
  %s2 = inlined_call_operand.hbm [shape: f32[1,256], index: 2, kind: input, shape index: {}]
  %s3 = inlined_call_operand.vmem [shape: bf16[256,128], index: 3, kind: input, shape index: {}]
  %s4 = inlined_call_operand.<no memory space> [shape: f32[1,1], index: 4, kind: input, shape index: {}]
  %s5 = inlined_call_operand.vmem [shape: f32[512,1], index: 5, kind: output, shape index: {}]
  %s6 = sld [smem:[#allocation0]]
  $region61: #{network_forward.1} parent=0
    _
  %s8 = ssub.s32 1, %s6
  %s9 = scalar_select 0, %s8, %s6
  %v10 = vstv %s4
  %11 = vst [vmem:[#allocation2] sm:$0x1] %v10
  $region1: #{network_forward.1} parent=0
    #allocation3 [shape = 'u8[2097152]{0}', space=vmem, size = 0x200000, scoped, tag = 'input window, operand 0']
    #allocation4 [shape = 's32[2]{0}', space=sflag, size = 0x8, scoped, tag = 'scoped memory for network_forward.1']
    #allocation5 [shape = 'u8[1024]{0}', space=vmem, size = 0x400, scoped, tag = 'input window, operand 2, single buffered']
    #allocation6 [shape = 's32[1]{0}', space=sflag, size = 0x4, scoped, tag = 'scoped memory for network_forward.1']
    %12 = vsyncpa [#allocation4], 0
    %s13 = scalar_lea.sflag [#allocation4], 1
    %14 = vsyncpa %s13, 0
    %15 = vsyncpa [#allocation6], 0
    loop: start=0, step=1, limit=4
    $region2: #{network_forward.1} parent=1 // loop_pre_header
      _
    $region3: #{network_forward.1} parent=1 // loop_header
      %s17 = sphi 0, %s21
      %p18 = scmp.ge.s32.totalorder %s17, 4
      %s27 = sphi 0, %s29
      %s30 = sphi 0, %s27
      %s31 = sphi 0, %s30
      %s47 = sphi 0, %s31
      %s51 = sphi 0, %s51
      %s53 = sphi 0, %s51
      %s54 = sphi 0, %s53
      %s68 = sphi 0, %s54
      %s72 = sphi 0, %s72
      %s74 = sphi 0, %s72
      %s75 = sphi 0, %s74
      %s89 = sphi 0, %s75
      %s93 = sphi 0, %s93
      %s95 = sphi 0, %s93
      %s96 = sphi 0, %s95
      %s110 = sphi 0, %s96
      %s114 = sphi 0, %s114
      %s116 = sphi 0, %s114
      %s117 = sphi 0, %s116
      %s131 = sphi 0, %s117
      %s137 = sphi 0, %s139
      %s140 = sphi 0, %s137
      %s141 = sphi 0, %s140
      %s157 = sphi 0, %s141
    $region4: #{network_forward.1} parent=1 // loop_header_branch
      %20 = sbr.rel (%p18) target = $region8
    $region5: #{network_forward.1} parent=1 // loop_body
      %s22 = ssub.s32 %s17, 1
      %s23 = ssub.s32 %s17, 2
      %s24 = sadd.s32 %s17, 1
      %s25 = ssub.s32 %s17, %s24
      %p26 = scmp.eq.s32.totalorder %s25, 0
      %s28 = sadd.s32 %s27, 1
      %s29 = scalar_select %p26, %s27, %s28
      %p32 = pneg %p26
      %p33 = scmp.eq.s32.totalorder %s17, 1
      %p34 = por %p32, %p33
      %p35 = scmp.ne.s32.totalorder %s27, %s30
      %p36 = scmp.eq.s32.totalorder %s17, 0
      %p37 = por %p35, %p36
      %p38 = scmp.ne.s32.totalorder %s27, %s30
      %p39 = scmp.eq.s32.totalorder %s22, 1
      %p40 = por %p38, %p39
      %p41 = scmp.ne.s32.totalorder %s30, %s31
      %p42 = scmp.eq.s32.totalorder %s22, 0
      %p43 = por %p41, %p42
      %p44 = scmp.ne.s32.totalorder %s30, %s31
      %p45 = scmp.eq.s32.totalorder %s23, 1
      %p46 = por %p44, %p45
      %p48 = scmp.ne.s32.totalorder %s31, %s47
      %p49 = scmp.eq.s32.totalorder %s23, 0
      %p50 = por %p48, %p49
      %s52 = sadd.s32 %s51, 1
      %p55 = scmp.eq.s32.totalorder %s17, 1
      %p56 = scmp.ne.s32.totalorder %s51, %s53
      %p57 = scmp.eq.s32.totalorder %s17, 0
      %p58 = por %p56, %p57
      %p59 = scmp.ne.s32.totalorder %s51, %s53
      %p60 = scmp.eq.s32.totalorder %s22, 1
      %p61 = por %p59, %p60
      %p62 = scmp.ne.s32.totalorder %s53, %s54
      %p63 = scmp.eq.s32.totalorder %s22, 0
      %p64 = por %p62, %p63
      %p65 = scmp.ne.s32.totalorder %s53, %s54
      %p66 = scmp.eq.s32.totalorder %s23, 1
      %p67 = por %p65, %p66
      %p69 = scmp.ne.s32.totalorder %s54, %s68
      %p70 = scmp.eq.s32.totalorder %s23, 0
      %p71 = por %p69, %p70
      %s73 = sadd.s32 %s72, 1
      %p76 = scmp.eq.s32.totalorder %s17, 1
      %p77 = scmp.ne.s32.totalorder %s72, %s74
      %p78 = scmp.eq.s32.totalorder %s17, 0
      %p79 = por %p77, %p78
      %p80 = scmp.ne.s32.totalorder %s72, %s74
      %p81 = scmp.eq.s32.totalorder %s22, 1
      %p82 = por %p80, %p81
      %p83 = scmp.ne.s32.totalorder %s74, %s75
      %p84 = scmp.eq.s32.totalorder %s22, 0
      %p85 = por %p83, %p84
      %p86 = scmp.ne.s32.totalorder %s74, %s75
      %p87 = scmp.eq.s32.totalorder %s23, 1
      %p88 = por %p86, %p87
      %p90 = scmp.ne.s32.totalorder %s75, %s89
      %p91 = scmp.eq.s32.totalorder %s23, 0
      %p92 = por %p90, %p91
      %s94 = sadd.s32 %s93, 1
      %p97 = scmp.eq.s32.totalorder %s17, 1
      %p98 = scmp.ne.s32.totalorder %s93, %s95
      %p99 = scmp.eq.s32.totalorder %s17, 0
      %p100 = por %p98, %p99
      %p101 = scmp.ne.s32.totalorder %s93, %s95
      %p102 = scmp.eq.s32.totalorder %s22, 1
      %p103 = por %p101, %p102
      %p104 = scmp.ne.s32.totalorder %s95, %s96
      %p105 = scmp.eq.s32.totalorder %s22, 0
      %p106 = por %p104, %p105
      %p107 = scmp.ne.s32.totalorder %s95, %s96
      %p108 = scmp.eq.s32.totalorder %s23, 1
      %p109 = por %p107, %p108
      %p111 = scmp.ne.s32.totalorder %s96, %s110
      %p112 = scmp.eq.s32.totalorder %s23, 0
      %p113 = por %p111, %p112
      %s115 = sadd.s32 %s114, 1
      %p118 = scmp.eq.s32.totalorder %s17, 1
      %p119 = scmp.ne.s32.totalorder %s114, %s116
      %p120 = scmp.eq.s32.totalorder %s17, 0
      %p121 = por %p119, %p120
      %p122 = scmp.ne.s32.totalorder %s114, %s116
      %p123 = scmp.eq.s32.totalorder %s22, 1
      %p124 = por %p122, %p123
      %p125 = scmp.ne.s32.totalorder %s116, %s117
      %p126 = scmp.eq.s32.totalorder %s22, 0
      %p127 = por %p125, %p126
      %p128 = scmp.ne.s32.totalorder %s116, %s117
      %p129 = scmp.eq.s32.totalorder %s23, 1
      %p130 = por %p128, %p129
      %p132 = scmp.ne.s32.totalorder %s117, %s131
      %p133 = scmp.eq.s32.totalorder %s23, 0
      %p134 = por %p132, %p133
      %s135 = ssub.s32 %s17, %s24
      %p136 = scmp.eq.s32.totalorder %s135, 0
      %s138 = sadd.s32 %s137, 1
      %s139 = scalar_select %p136, %s137, %s138
      %p142 = pneg %p136
      %p143 = scmp.eq.s32.totalorder %s17, 1
      %p144 = por %p142, %p143
      %p145 = scmp.ne.s32.totalorder %s137, %s140
      %p146 = scmp.eq.s32.totalorder %s17, 0
      %p147 = por %p145, %p146
      %p148 = scmp.ne.s32.totalorder %s137, %s140
      %p149 = scmp.eq.s32.totalorder %s22, 1
      %p150 = por %p148, %p149
      %p151 = scmp.ne.s32.totalorder %s140, %s141
      %p152 = scmp.eq.s32.totalorder %s22, 0
      %p153 = por %p151, %p152
      %p154 = scmp.ne.s32.totalorder %s140, %s141
      %p155 = scmp.eq.s32.totalorder %s23, 1
      %p156 = por %p154, %p155
      %p158 = scmp.ne.s32.totalorder %s141, %s157
      %p159 = scmp.eq.s32.totalorder %s23, 0
      %p160 = por %p158, %p159
      %p161 = scmp.le.s32.totalorder 1, %s17
      %p162 = scmp.lt.s32.totalorder %s17, 3
      %p163 = pnand %p161, %p162
      %p164 = pneg %p163
      // Predicated region
      $region9: #{network_forward.1} parent=5 // pred_check
        _
      $region10: #{network_forward.1} parent=5 // pred_check_branch
        %166 = sbr.rel (%p163) target = $region12
      $region11: #{network_forward.1} parent=5 // pred_region
        %s167 = ssub.s32 %s17, 1
        // Predicated region
        $region13: #{network_forward.1} parent=11 // pred_check
          %p168 = pneg %p64
        $region14: #{network_forward.1} parent=11 // pred_check_branch
          %170 = sbr.rel (%p168) target = $region16
        $region15: #{network_forward.1} parent=11 // pred_region
          _
        $region16: #{network_forward.1} parent=11 // pred_fallthru
          _
        // Predicated region
        $region17: #{network_forward.1} parent=11 // pred_check
          %p171 = pneg %p85
        $region18: #{network_forward.1} parent=11 // pred_check_branch
          %173 = sbr.rel (%p171) target = $region20
        $region19: #{network_forward.1} parent=11 // pred_region
          %s175 = ssub.s32 32, 32
          %176 = vsyncadd [#allocation6], %s175
          %s178 = sshll.u32 [#allocation5], 4
          %s179 = int_to_ptr.vmem [resolvable:$true] %s178
          %181 = dma.hbm_to_vmem [thread:$0]  %s2, 32, %s179, [#allocation6]
        $region20: #{network_forward.1} parent=11 // pred_fallthru
          _
        // Predicated region
        $region21: #{network_forward.1} parent=11 // pred_check
          %p182 = pneg %p106
        $region22: #{network_forward.1} parent=11 // pred_check_branch
          %184 = sbr.rel (%p182) target = $region24
        $region23: #{network_forward.1} parent=11 // pred_region
          _
        $region24: #{network_forward.1} parent=11 // pred_fallthru
          _
        // Predicated region
        $region25: #{network_forward.1} parent=11 // pred_check
          %p185 = pneg %p127
        $region26: #{network_forward.1} parent=11 // pred_check_branch
          %187 = sbr.rel (%p185) target = $region28
        $region27: #{network_forward.1} parent=11 // pred_region
          _
        $region28: #{network_forward.1} parent=11 // pred_fallthru
          _
      $region12: #{network_forward.1} parent=5 // pred_fallthru
        _
      %p188 = scmp.lt.s32.totalorder %s17, 2
      // Predicated region
      $region29: #{network_forward.1} parent=5 // pred_check
        %p189 = pneg %p188
      $region30: #{network_forward.1} parent=5 // pred_check_branch
        %191 = sbr.rel (%p189) target = $region32
      $region31: #{network_forward.1} parent=5 // pred_region
        // Predicated region
        $region33: #{network_forward.1} parent=31 // pred_check
          %p192 = pneg %p37
        $region34: #{network_forward.1} parent=31 // pred_check_branch
          %194 = sbr.rel (%p192) target = $region36
        $region35: #{network_forward.1} parent=31 // pred_region
          %s195 = sand.u32 %s27, 1
          %s196 = scalar_lea.sflag [#allocation4], %s195
          %s197 = sand.u32 %s27, 1
          %s198 = smul.addr %s197, 2048
          %s199 = scalar_lea.vmem [#allocation3], %s198
          %s200 = smul.u32 32, %s17
          %s202 = ssub.s32 32768, 32768
          %203 = vsyncadd %s196, %s202
          %s204 = smul.addr %s200, 8
          %s205 = smul.addr %s204, 128
          %s206 = scalar_lea.hbm %s0, %s205
          %s207 = sshll.u32 %s199, 4
          %s208 = int_to_ptr.vmem [resolvable:$true] %s207
          %213 = dma.hbm_to_vmem [thread:$0]  %s206, 32768, %s208, %s196, 1024, 1024, 64
        $region36: #{network_forward.1} parent=31 // pred_fallthru
          _
      $region32: #{network_forward.1} parent=5 // pred_fallthru
        _
      %p214 = scmp.le.s32.totalorder 1, %s17
      %p215 = scmp.lt.s32.totalorder %s17, 3
      %p216 = pnand %p214, %p215
      %p217 = pneg %p216
      // Predicated region
      $region37: #{network_forward.1} parent=5 // pred_check
        _
      $region38: #{network_forward.1} parent=5 // pred_check_branch
        %219 = sbr.rel (%p216) target = $region40
      $region39: #{network_forward.1} parent=5 // pred_region
        %s220 = ssub.s32 %s17, 1
        %s221 = sand.u32 %s30, 1
        %s222 = scalar_lea.sflag [#allocation4], %s221
        %s223 = sand.u32 %s30, 1
        %s224 = smul.addr %s223, 2048
        %s225 = scalar_lea.vmem [#allocation3], %s224
        // Predicated region
        $region41: #{network_forward.1} parent=39 // pred_check
          %p226 = pneg %p43
        $region42: #{network_forward.1} parent=39 // pred_check_branch
          %228 = sbr.rel (%p226) target = $region44
        $region43: #{network_forward.1} parent=39 // pred_region
          %229 = dma.done %s222, 32768
        $region44: #{network_forward.1} parent=39 // pred_fallthru
          _
        // Predicated region
        $region45: #{network_forward.1} parent=39 // pred_check
          %p230 = pneg %p85
        $region46: #{network_forward.1} parent=39 // pred_check_branch
          %232 = sbr.rel (%p230) target = $region48
        $region47: #{network_forward.1} parent=39 // pred_region
          %233 = dma.done [#allocation6], 32
        $region48: #{network_forward.1} parent=39 // pred_fallthru
          _
        %s234 = sand.u32 %s30, 1
        %s235 = scalar_lea.sflag [#allocation4], %s234
        %s236 = sand.u32 %s30, 1
        %s237 = smul.addr %s236, 2048
        %s238 = scalar_lea.vmem [#allocation3], %s237
        %p239 = pneg %p43
        %p240 = pneg %p40
        %p241 = pneg %p64
        %p242 = pneg %p61
        %p243 = pneg %p85
        %p244 = pneg %p82
        %p245 = pneg %p106
        %p246 = pneg %p103
        %p247 = pneg %p127
        %p248 = pneg %p124
        %p249 = pneg %p153
        %p250 = pneg %p150
        %s251 = smul.u32 32, %s22
        %p252 = scmp.lt.s32.totalorder %s251, 63
        %s253 = scalar_select %p252, %s251, 63
        %s254 = smul.addr %s253, 8
        %s255 = scalar_lea.vmem %s5, %s254
        %s256 = smul.u32 32, %s22
        %s257 = smul.u32 32, %s22
        %p258 = scmp.lt.s32.totalorder %s257, 63
        %s259 = scalar_select %p258, %s257, 63
        %s260 = smul.addr %s259, 8
        %s261 = scalar_lea.vmem %s5, %s260
        %s262 = smul.u32 32, %s22
        %v264 = vld [vmem:[%s225] sm:$0xff]
        %v265 = vld [vmem:[%s225 + $0x8] sm:$0xff]
        %v266 = vld [vmem:[%s225 + $0x10] sm:$0xff]
        %v267 = vld [vmem:[%s225 + $0x18] sm:$0xff]
        %v268 = vld [vmem:[%s225 + $0x20] sm:$0xff]
        %v269 = vld [vmem:[%s225 + $0x28] sm:$0xff]
        %v270 = vld [vmem:[%s225 + $0x30] sm:$0xff]
        %v271 = vld [vmem:[%s225 + $0x38] sm:$0xff]
        %v272 = vld [vmem:[%s225 + $0x40] sm:$0xff]
        %v273 = vld [vmem:[%s225 + $0x48] sm:$0xff]
        %v274 = vld [vmem:[%s225 + $0x50] sm:$0xff]
        %v275 = vld [vmem:[%s225 + $0x58] sm:$0xff]
        %v276 = vld [vmem:[%s225 + $0x60] sm:$0xff]
        %v277 = vld [vmem:[%s225 + $0x68] sm:$0xff]
        %v278 = vld [vmem:[%s225 + $0x70] sm:$0xff]
        %v279 = vld [vmem:[%s225 + $0x78] sm:$0xff]
        %v280 = vld [vmem:[%s225 + $0x80] sm:$0xff]
        %v281 = vld [vmem:[%s225 + $0x88] sm:$0xff]
        %v282 = vld [vmem:[%s225 + $0x90] sm:$0xff]
        %v283 = vld [vmem:[%s225 + $0x98] sm:$0xff]
        %v284 = vld [vmem:[%s225 + $0xa0] sm:$0xff]
        %v285 = vld [vmem:[%s225 + $0xa8] sm:$0xff]
        %v286 = vld [vmem:[%s225 + $0xb0] sm:$0xff]
        %v287 = vld [vmem:[%s225 + $0xb8] sm:$0xff]
        %v288 = vld [vmem:[%s225 + $0xc0] sm:$0xff]
        %v289 = vld [vmem:[%s225 + $0xc8] sm:$0xff]
        %v290 = vld [vmem:[%s225 + $0xd0] sm:$0xff]
        %v291 = vld [vmem:[%s225 + $0xd8] sm:$0xff]
        %v292 = vld [vmem:[%s225 + $0xe0] sm:$0xff]
        %v293 = vld [vmem:[%s225 + $0xe8] sm:$0xff]
        %v294 = vld [vmem:[%s225 + $0xf0] sm:$0xff]
        %v295 = vld [vmem:[%s225 + $0xf8] sm:$0xff]
        %v296 = vld [vmem:[%s225 + $0x100] sm:$0xff]
        %v297 = vld [vmem:[%s225 + $0x108] sm:$0xff]
        %v298 = vld [vmem:[%s225 + $0x110] sm:$0xff]
        %v299 = vld [vmem:[%s225 + $0x118] sm:$0xff]
        %v300 = vld [vmem:[%s225 + $0x120] sm:$0xff]
        %v301 = vld [vmem:[%s225 + $0x128] sm:$0xff]
        %v302 = vld [vmem:[%s225 + $0x130] sm:$0xff]
        %v303 = vld [vmem:[%s225 + $0x138] sm:$0xff]
        %v304 = vld [vmem:[%s225 + $0x140] sm:$0xff]
        %v305 = vld [vmem:[%s225 + $0x148] sm:$0xff]
        %v306 = vld [vmem:[%s225 + $0x150] sm:$0xff]
        %v307 = vld [vmem:[%s225 + $0x158] sm:$0xff]
        %v308 = vld [vmem:[%s225 + $0x160] sm:$0xff]
        %v309 = vld [vmem:[%s225 + $0x168] sm:$0xff]
        %v310 = vld [vmem:[%s225 + $0x170] sm:$0xff]
        %v311 = vld [vmem:[%s225 + $0x178] sm:$0xff]
        %v312 = vld [vmem:[%s225 + $0x180] sm:$0xff]
        %v313 = vld [vmem:[%s225 + $0x188] sm:$0xff]
        %v314 = vld [vmem:[%s225 + $0x190] sm:$0xff]
        %v315 = vld [vmem:[%s225 + $0x198] sm:$0xff]
        %v316 = vld [vmem:[%s225 + $0x1a0] sm:$0xff]
        %v317 = vld [vmem:[%s225 + $0x1a8] sm:$0xff]
        %v318 = vld [vmem:[%s225 + $0x1b0] sm:$0xff]
        %v319 = vld [vmem:[%s225 + $0x1b8] sm:$0xff]
        %v320 = vld [vmem:[%s225 + $0x1c0] sm:$0xff]
        %v321 = vld [vmem:[%s225 + $0x1c8] sm:$0xff]
        %v322 = vld [vmem:[%s225 + $0x1d0] sm:$0xff]
        %v323 = vld [vmem:[%s225 + $0x1d8] sm:$0xff]
        %v324 = vld [vmem:[%s225 + $0x1e0] sm:$0xff]
        %v325 = vld [vmem:[%s225 + $0x1e8] sm:$0xff]
        %v326 = vld [vmem:[%s225 + $0x1f0] sm:$0xff]
        %v327 = vld [vmem:[%s225 + $0x1f8] sm:$0xff]
        %v328 = vld [vmem:[%s225 + $0x200] sm:$0xff]
        %v329 = vld [vmem:[%s225 + $0x208] sm:$0xff]
        %v330 = vld [vmem:[%s225 + $0x210] sm:$0xff]
        %v331 = vld [vmem:[%s225 + $0x218] sm:$0xff]
        %v332 = vld [vmem:[%s225 + $0x220] sm:$0xff]
        %v333 = vld [vmem:[%s225 + $0x228] sm:$0xff]
        %v334 = vld [vmem:[%s225 + $0x230] sm:$0xff]
        %v335 = vld [vmem:[%s225 + $0x238] sm:$0xff]
        %v336 = vld [vmem:[%s225 + $0x240] sm:$0xff]
        %v337 = vld [vmem:[%s225 + $0x248] sm:$0xff]
        %v338 = vld [vmem:[%s225 + $0x250] sm:$0xff]
        %v339 = vld [vmem:[%s225 + $0x258] sm:$0xff]
        %v340 = vld [vmem:[%s225 + $0x260] sm:$0xff]
        %v341 = vld [vmem:[%s225 + $0x268] sm:$0xff]
        %v342 = vld [vmem:[%s225 + $0x270] sm:$0xff]
        %v343 = vld [vmem:[%s225 + $0x278] sm:$0xff]
        %v344 = vld [vmem:[%s225 + $0x280] sm:$0xff]
        %v345 = vld [vmem:[%s225 + $0x288] sm:$0xff]
        %v346 = vld [vmem:[%s225 + $0x290] sm:$0xff]
        %v347 = vld [vmem:[%s225 + $0x298] sm:$0xff]
        %v348 = vld [vmem:[%s225 + $0x2a0] sm:$0xff]
        %v349 = vld [vmem:[%s225 + $0x2a8] sm:$0xff]
        %v350 = vld [vmem:[%s225 + $0x2b0] sm:$0xff]
        %v351 = vld [vmem:[%s225 + $0x2b8] sm:$0xff]
        %v352 = vld [vmem:[%s225 + $0x2c0] sm:$0xff]
        %v353 = vld [vmem:[%s225 + $0x2c8] sm:$0xff]
        %v354 = vld [vmem:[%s225 + $0x2d0] sm:$0xff]
        %v355 = vld [vmem:[%s225 + $0x2d8] sm:$0xff]
        %v356 = vld [vmem:[%s225 + $0x2e0] sm:$0xff]
        %v357 = vld [vmem:[%s225 + $0x2e8] sm:$0xff]
        %v358 = vld [vmem:[%s225 + $0x2f0] sm:$0xff]
        %v359 = vld [vmem:[%s225 + $0x2f8] sm:$0xff]
        %v360 = vld [vmem:[%s225 + $0x300] sm:$0xff]
        %v361 = vld [vmem:[%s225 + $0x308] sm:$0xff]
        %v362 = vld [vmem:[%s225 + $0x310] sm:$0xff]
        %v363 = vld [vmem:[%s225 + $0x318] sm:$0xff]
        %v364 = vld [vmem:[%s225 + $0x320] sm:$0xff]
        %v365 = vld [vmem:[%s225 + $0x328] sm:$0xff]
        %v366 = vld [vmem:[%s225 + $0x330] sm:$0xff]
        %v367 = vld [vmem:[%s225 + $0x338] sm:$0xff]
        %v368 = vld [vmem:[%s225 + $0x340] sm:$0xff]
        %v369 = vld [vmem:[%s225 + $0x348] sm:$0xff]
        %v370 = vld [vmem:[%s225 + $0x350] sm:$0xff]
        %v371 = vld [vmem:[%s225 + $0x358] sm:$0xff]
        %v372 = vld [vmem:[%s225 + $0x360] sm:$0xff]
        %v373 = vld [vmem:[%s225 + $0x368] sm:$0xff]
        %v374 = vld [vmem:[%s225 + $0x370] sm:$0xff]
        %v375 = vld [vmem:[%s225 + $0x378] sm:$0xff]
        %v376 = vld [vmem:[%s225 + $0x380] sm:$0xff]
        %v377 = vld [vmem:[%s225 + $0x388] sm:$0xff]
        %v378 = vld [vmem:[%s225 + $0x390] sm:$0xff]
        %v379 = vld [vmem:[%s225 + $0x398] sm:$0xff]
        %v380 = vld [vmem:[%s225 + $0x3a0] sm:$0xff]
        %v381 = vld [vmem:[%s225 + $0x3a8] sm:$0xff]
        %v382 = vld [vmem:[%s225 + $0x3b0] sm:$0xff]
        %v383 = vld [vmem:[%s225 + $0x3b8] sm:$0xff]
        %v384 = vld [vmem:[%s225 + $0x3c0] sm:$0xff]
        %v385 = vld [vmem:[%s225 + $0x3c8] sm:$0xff]
        %v386 = vld [vmem:[%s225 + $0x3d0] sm:$0xff]
        %v387 = vld [vmem:[%s225 + $0x3d8] sm:$0xff]
        %v388 = vld [vmem:[%s225 + $0x3e0] sm:$0xff]
        %v389 = vld [vmem:[%s225 + $0x3e8] sm:$0xff]
        %v390 = vld [vmem:[%s225 + $0x3f0] sm:$0xff]
        %v391 = vld [vmem:[%s225 + $0x3f8] sm:$0xff]
        %v392 = vld [vmem:[%s225 + $0x400] sm:$0xff]
        %v393 = vld [vmem:[%s225 + $0x408] sm:$0xff]
        %v394 = vld [vmem:[%s225 + $0x410] sm:$0xff]
        %v395 = vld [vmem:[%s225 + $0x418] sm:$0xff]
        %v396 = vld [vmem:[%s225 + $0x420] sm:$0xff]
        %v397 = vld [vmem:[%s225 + $0x428] sm:$0xff]
        %v398 = vld [vmem:[%s225 + $0x430] sm:$0xff]
        %v399 = vld [vmem:[%s225 + $0x438] sm:$0xff]
        %v400 = vld [vmem:[%s225 + $0x440] sm:$0xff]
        %v401 = vld [vmem:[%s225 + $0x448] sm:$0xff]
        %v402 = vld [vmem:[%s225 + $0x450] sm:$0xff]
        %v403 = vld [vmem:[%s225 + $0x458] sm:$0xff]
        %v404 = vld [vmem:[%s225 + $0x460] sm:$0xff]
        %v405 = vld [vmem:[%s225 + $0x468] sm:$0xff]
        %v406 = vld [vmem:[%s225 + $0x470] sm:$0xff]
        %v407 = vld [vmem:[%s225 + $0x478] sm:$0xff]
        %v408 = vld [vmem:[%s225 + $0x480] sm:$0xff]
        %v409 = vld [vmem:[%s225 + $0x488] sm:$0xff]
        %v410 = vld [vmem:[%s225 + $0x490] sm:$0xff]
        %v411 = vld [vmem:[%s225 + $0x498] sm:$0xff]
        %v412 = vld [vmem:[%s225 + $0x4a0] sm:$0xff]
        %v413 = vld [vmem:[%s225 + $0x4a8] sm:$0xff]
        %v414 = vld [vmem:[%s225 + $0x4b0] sm:$0xff]
        %v415 = vld [vmem:[%s225 + $0x4b8] sm:$0xff]
        %v416 = vld [vmem:[%s225 + $0x4c0] sm:$0xff]
        %v417 = vld [vmem:[%s225 + $0x4c8] sm:$0xff]
        %v418 = vld [vmem:[%s225 + $0x4d0] sm:$0xff]
        %v419 = vld [vmem:[%s225 + $0x4d8] sm:$0xff]
        %v420 = vld [vmem:[%s225 + $0x4e0] sm:$0xff]
        %v421 = vld [vmem:[%s225 + $0x4e8] sm:$0xff]
        %v422 = vld [vmem:[%s225 + $0x4f0] sm:$0xff]
        %v423 = vld [vmem:[%s225 + $0x4f8] sm:$0xff]
        %v424 = vld [vmem:[%s225 + $0x500] sm:$0xff]
        %v425 = vld [vmem:[%s225 + $0x508] sm:$0xff]
        %v426 = vld [vmem:[%s225 + $0x510] sm:$0xff]
        %v427 = vld [vmem:[%s225 + $0x518] sm:$0xff]
        %v428 = vld [vmem:[%s225 + $0x520] sm:$0xff]
        %v429 = vld [vmem:[%s225 + $0x528] sm:$0xff]
        %v430 = vld [vmem:[%s225 + $0x530] sm:$0xff]
        %v431 = vld [vmem:[%s225 + $0x538] sm:$0xff]
        %v432 = vld [vmem:[%s225 + $0x540] sm:$0xff]
        %v433 = vld [vmem:[%s225 + $0x548] sm:$0xff]
        %v434 = vld [vmem:[%s225 + $0x550] sm:$0xff]
        %v435 = vld [vmem:[%s225 + $0x558] sm:$0xff]
        %v436 = vld [vmem:[%s225 + $0x560] sm:$0xff]
        %v437 = vld [vmem:[%s225 + $0x568] sm:$0xff]
        %v438 = vld [vmem:[%s225 + $0x570] sm:$0xff]
        %v439 = vld [vmem:[%s225 + $0x578] sm:$0xff]
        %v440 = vld [vmem:[%s225 + $0x580] sm:$0xff]
        %v441 = vld [vmem:[%s225 + $0x588] sm:$0xff]
        %v442 = vld [vmem:[%s225 + $0x590] sm:$0xff]
        %v443 = vld [vmem:[%s225 + $0x598] sm:$0xff]
        %v444 = vld [vmem:[%s225 + $0x5a0] sm:$0xff]
        %v445 = vld [vmem:[%s225 + $0x5a8] sm:$0xff]
        %v446 = vld [vmem:[%s225 + $0x5b0] sm:$0xff]
        %v447 = vld [vmem:[%s225 + $0x5b8] sm:$0xff]
        %v448 = vld [vmem:[%s225 + $0x5c0] sm:$0xff]
        %v449 = vld [vmem:[%s225 + $0x5c8] sm:$0xff]
        %v450 = vld [vmem:[%s225 + $0x5d0] sm:$0xff]
        %v451 = vld [vmem:[%s225 + $0x5d8] sm:$0xff]
        %v452 = vld [vmem:[%s225 + $0x5e0] sm:$0xff]
        %v453 = vld [vmem:[%s225 + $0x5e8] sm:$0xff]
        %v454 = vld [vmem:[%s225 + $0x5f0] sm:$0xff]
        %v455 = vld [vmem:[%s225 + $0x5f8] sm:$0xff]
        %v456 = vld [vmem:[%s225 + $0x600] sm:$0xff]
        %v457 = vld [vmem:[%s225 + $0x608] sm:$0xff]
        %v458 = vld [vmem:[%s225 + $0x610] sm:$0xff]
        %v459 = vld [vmem:[%s225 + $0x618] sm:$0xff]
        %v460 = vld [vmem:[%s225 + $0x620] sm:$0xff]
        %v461 = vld [vmem:[%s225 + $0x628] sm:$0xff]
        %v462 = vld [vmem:[%s225 + $0x630] sm:$0xff]
        %v463 = vld [vmem:[%s225 + $0x638] sm:$0xff]
        %v464 = vld [vmem:[%s225 + $0x640] sm:$0xff]
        %v465 = vld [vmem:[%s225 + $0x648] sm:$0xff]
        %v466 = vld [vmem:[%s225 + $0x650] sm:$0xff]
        %v467 = vld [vmem:[%s225 + $0x658] sm:$0xff]
        %v468 = vld [vmem:[%s225 + $0x660] sm:$0xff]
        %v469 = vld [vmem:[%s225 + $0x668] sm:$0xff]
        %v470 = vld [vmem:[%s225 + $0x670] sm:$0xff]
        %v471 = vld [vmem:[%s225 + $0x678] sm:$0xff]
        %v472 = vld [vmem:[%s225 + $0x680] sm:$0xff]
        %v473 = vld [vmem:[%s225 + $0x688] sm:$0xff]
        %v474 = vld [vmem:[%s225 + $0x690] sm:$0xff]
        %v475 = vld [vmem:[%s225 + $0x698] sm:$0xff]
        %v476 = vld [vmem:[%s225 + $0x6a0] sm:$0xff]
        %v477 = vld [vmem:[%s225 + $0x6a8] sm:$0xff]
        %v478 = vld [vmem:[%s225 + $0x6b0] sm:$0xff]
        %v479 = vld [vmem:[%s225 + $0x6b8] sm:$0xff]
        %v480 = vld [vmem:[%s225 + $0x6c0] sm:$0xff]
        %v481 = vld [vmem:[%s225 + $0x6c8] sm:$0xff]
        %v482 = vld [vmem:[%s225 + $0x6d0] sm:$0xff]
        %v483 = vld [vmem:[%s225 + $0x6d8] sm:$0xff]
        %v484 = vld [vmem:[%s225 + $0x6e0] sm:$0xff]
        %v485 = vld [vmem:[%s225 + $0x6e8] sm:$0xff]
        %v486 = vld [vmem:[%s225 + $0x6f0] sm:$0xff]
        %v487 = vld [vmem:[%s225 + $0x6f8] sm:$0xff]
        %v488 = vld [vmem:[%s225 + $0x700] sm:$0xff]
        %v489 = vld [vmem:[%s225 + $0x708] sm:$0xff]
        %v490 = vld [vmem:[%s225 + $0x710] sm:$0xff]
        %v491 = vld [vmem:[%s225 + $0x718] sm:$0xff]
        %v492 = vld [vmem:[%s225 + $0x720] sm:$0xff]
        %v493 = vld [vmem:[%s225 + $0x728] sm:$0xff]
        %v494 = vld [vmem:[%s225 + $0x730] sm:$0xff]
        %v495 = vld [vmem:[%s225 + $0x738] sm:$0xff]
        %v496 = vld [vmem:[%s225 + $0x740] sm:$0xff]
        %v497 = vld [vmem:[%s225 + $0x748] sm:$0xff]
        %v498 = vld [vmem:[%s225 + $0x750] sm:$0xff]
        %v499 = vld [vmem:[%s225 + $0x758] sm:$0xff]
        %v500 = vld [vmem:[%s225 + $0x760] sm:$0xff]
        %v501 = vld [vmem:[%s225 + $0x768] sm:$0xff]
        %v502 = vld [vmem:[%s225 + $0x770] sm:$0xff]
        %v503 = vld [vmem:[%s225 + $0x778] sm:$0xff]
        %v504 = vld [vmem:[%s225 + $0x780] sm:$0xff]
        %v505 = vld [vmem:[%s225 + $0x788] sm:$0xff]
        %v506 = vld [vmem:[%s225 + $0x790] sm:$0xff]
        %v507 = vld [vmem:[%s225 + $0x798] sm:$0xff]
        %v508 = vld [vmem:[%s225 + $0x7a0] sm:$0xff]
        %v509 = vld [vmem:[%s225 + $0x7a8] sm:$0xff]
        %v510 = vld [vmem:[%s225 + $0x7b0] sm:$0xff]
        %v511 = vld [vmem:[%s225 + $0x7b8] sm:$0xff]
        %v512 = vld [vmem:[%s225 + $0x7c0] sm:$0xff]
        %v513 = vld [vmem:[%s225 + $0x7c8] sm:$0xff]
        %v514 = vld [vmem:[%s225 + $0x7d0] sm:$0xff]
        %v515 = vld [vmem:[%s225 + $0x7d8] sm:$0xff]
        %v516 = vld [vmem:[%s225 + $0x7e0] sm:$0xff]
        %v517 = vld [vmem:[%s225 + $0x7e8] sm:$0xff]
        %v518 = vld [vmem:[%s225 + $0x7f0] sm:$0xff]
        %v519 = vld [vmem:[%s225 + $0x7f8] sm:$0xff]
        %v520 = vpack.c.bf16 %v272, %v264
        %v521 = vpack.c.bf16 %v273, %v265
        %v522 = vpack.c.bf16 %v274, %v266
        %v523 = vpack.c.bf16 %v275, %v267
        %v524 = vpack.c.bf16 %v276, %v268
        %v525 = vpack.c.bf16 %v277, %v269
        %v526 = vpack.c.bf16 %v278, %v270
        %v527 = vpack.c.bf16 %v279, %v271
        %v528 = vpack.c.bf16 %v288, %v280
        %v529 = vpack.c.bf16 %v289, %v281
        %v530 = vpack.c.bf16 %v290, %v282
        %v531 = vpack.c.bf16 %v291, %v283
        %v532 = vpack.c.bf16 %v292, %v284
        %v533 = vpack.c.bf16 %v293, %v285
        %v534 = vpack.c.bf16 %v294, %v286
        %v535 = vpack.c.bf16 %v295, %v287
        %v536 = vpack.c.bf16 %v304, %v296
        %v537 = vpack.c.bf16 %v305, %v297
        %v538 = vpack.c.bf16 %v306, %v298
        %v539 = vpack.c.bf16 %v307, %v299
        %v540 = vpack.c.bf16 %v308, %v300
        %v541 = vpack.c.bf16 %v309, %v301
        %v542 = vpack.c.bf16 %v310, %v302
        %v543 = vpack.c.bf16 %v311, %v303
        %v544 = vpack.c.bf16 %v320, %v312
        %v545 = vpack.c.bf16 %v321, %v313
        %v546 = vpack.c.bf16 %v322, %v314
        %v547 = vpack.c.bf16 %v323, %v315
        %v548 = vpack.c.bf16 %v324, %v316
        %v549 = vpack.c.bf16 %v325, %v317
        %v550 = vpack.c.bf16 %v326, %v318
        %v551 = vpack.c.bf16 %v327, %v319
        %v552 = vpack.c.bf16 %v336, %v328
        %v553 = vpack.c.bf16 %v337, %v329
        %v554 = vpack.c.bf16 %v338, %v330
        %v555 = vpack.c.bf16 %v339, %v331
        %v556 = vpack.c.bf16 %v340, %v332
        %v557 = vpack.c.bf16 %v341, %v333
        %v558 = vpack.c.bf16 %v342, %v334
        %v559 = vpack.c.bf16 %v343, %v335
        %v560 = vpack.c.bf16 %v352, %v344
        %v561 = vpack.c.bf16 %v353, %v345
        %v562 = vpack.c.bf16 %v354, %v346
        %v563 = vpack.c.bf16 %v355, %v347
        %v564 = vpack.c.bf16 %v356, %v348
        %v565 = vpack.c.bf16 %v357, %v349
        %v566 = vpack.c.bf16 %v358, %v350
        %v567 = vpack.c.bf16 %v359, %v351
        %v568 = vpack.c.bf16 %v368, %v360
        %v569 = vpack.c.bf16 %v369, %v361
        %v570 = vpack.c.bf16 %v370, %v362
        %v571 = vpack.c.bf16 %v371, %v363
        %v572 = vpack.c.bf16 %v372, %v364
        %v573 = vpack.c.bf16 %v373, %v365
        %v574 = vpack.c.bf16 %v374, %v366
        %v575 = vpack.c.bf16 %v375, %v367
        %v576 = vpack.c.bf16 %v384, %v376
        %v577 = vpack.c.bf16 %v385, %v377
        %v578 = vpack.c.bf16 %v386, %v378
        %v579 = vpack.c.bf16 %v387, %v379
        %v580 = vpack.c.bf16 %v388, %v380
        %v581 = vpack.c.bf16 %v389, %v381
        %v582 = vpack.c.bf16 %v390, %v382
        %v583 = vpack.c.bf16 %v391, %v383
        %v584 = vpack.c.bf16 %v400, %v392
        %v585 = vpack.c.bf16 %v401, %v393
        %v586 = vpack.c.bf16 %v402, %v394
        %v587 = vpack.c.bf16 %v403, %v395
        %v588 = vpack.c.bf16 %v404, %v396
        %v589 = vpack.c.bf16 %v405, %v397
        %v590 = vpack.c.bf16 %v406, %v398
        %v591 = vpack.c.bf16 %v407, %v399
        %v592 = vpack.c.bf16 %v416, %v408
        %v593 = vpack.c.bf16 %v417, %v409
        %v594 = vpack.c.bf16 %v418, %v410
        %v595 = vpack.c.bf16 %v419, %v411
        %v596 = vpack.c.bf16 %v420, %v412
        %v597 = vpack.c.bf16 %v421, %v413
        %v598 = vpack.c.bf16 %v422, %v414
        %v599 = vpack.c.bf16 %v423, %v415
        %v600 = vpack.c.bf16 %v432, %v424
        %v601 = vpack.c.bf16 %v433, %v425
        %v602 = vpack.c.bf16 %v434, %v426
        %v603 = vpack.c.bf16 %v435, %v427
        %v604 = vpack.c.bf16 %v436, %v428
        %v605 = vpack.c.bf16 %v437, %v429
        %v606 = vpack.c.bf16 %v438, %v430
        %v607 = vpack.c.bf16 %v439, %v431
        %v608 = vpack.c.bf16 %v448, %v440
        %v609 = vpack.c.bf16 %v449, %v441
        %v610 = vpack.c.bf16 %v450, %v442
        %v611 = vpack.c.bf16 %v451, %v443
        %v612 = vpack.c.bf16 %v452, %v444
        %v613 = vpack.c.bf16 %v453, %v445
        %v614 = vpack.c.bf16 %v454, %v446
        %v615 = vpack.c.bf16 %v455, %v447
        %v616 = vpack.c.bf16 %v464, %v456
        %v617 = vpack.c.bf16 %v465, %v457
        %v618 = vpack.c.bf16 %v466, %v458
        %v619 = vpack.c.bf16 %v467, %v459
        %v620 = vpack.c.bf16 %v468, %v460
        %v621 = vpack.c.bf16 %v469, %v461
        %v622 = vpack.c.bf16 %v470, %v462
        %v623 = vpack.c.bf16 %v471, %v463
        %v624 = vpack.c.bf16 %v480, %v472
        %v625 = vpack.c.bf16 %v481, %v473
        %v626 = vpack.c.bf16 %v482, %v474
        %v627 = vpack.c.bf16 %v483, %v475
        %v628 = vpack.c.bf16 %v484, %v476
        %v629 = vpack.c.bf16 %v485, %v477
        %v630 = vpack.c.bf16 %v486, %v478
        %v631 = vpack.c.bf16 %v487, %v479
        %v632 = vpack.c.bf16 %v496, %v488
        %v633 = vpack.c.bf16 %v497, %v489
        %v634 = vpack.c.bf16 %v498, %v490
        %v635 = vpack.c.bf16 %v499, %v491
        %v636 = vpack.c.bf16 %v500, %v492
        %v637 = vpack.c.bf16 %v501, %v493
        %v638 = vpack.c.bf16 %v502, %v494
        %v639 = vpack.c.bf16 %v503, %v495
        %v640 = vpack.c.bf16 %v512, %v504
        %v641 = vpack.c.bf16 %v513, %v505
        %v642 = vpack.c.bf16 %v514, %v506
        %v643 = vpack.c.bf16 %v515, %v507
        %v644 = vpack.c.bf16 %v516, %v508
        %v645 = vpack.c.bf16 %v517, %v509
        %v646 = vpack.c.bf16 %v518, %v510
        %v647 = vpack.c.bf16 %v519, %v511
        %v648 = vld [vmem:[%s1] sm:$0xff]
        %v649 = vld [vmem:[%s1 + $0x8] sm:$0xff]
        %v650 = vld [vmem:[%s1 + $0x10] sm:$0xff]
        %v651 = vld [vmem:[%s1 + $0x18] sm:$0xff]
        %v652 = vld [vmem:[%s1 + $0x20] sm:$0xff]
        %v653 = vld [vmem:[%s1 + $0x28] sm:$0xff]
        %v654 = vld [vmem:[%s1 + $0x30] sm:$0xff]
        %v655 = vld [vmem:[%s1 + $0x38] sm:$0xff]
        %v656 = vld [vmem:[%s1 + $0x40] sm:$0xff]
        %v657 = vld [vmem:[%s1 + $0x48] sm:$0xff]
        %v658 = vld [vmem:[%s1 + $0x50] sm:$0xff]
        %v659 = vld [vmem:[%s1 + $0x58] sm:$0xff]
        %v660 = vld [vmem:[%s1 + $0x60] sm:$0xff]
        %v661 = vld [vmem:[%s1 + $0x68] sm:$0xff]
        %v662 = vld [vmem:[%s1 + $0x70] sm:$0xff]
        %v663 = vld [vmem:[%s1 + $0x78] sm:$0xff]
        %v664 = vld [vmem:[%s1 + $0x80] sm:$0xff]
        %v665 = vld [vmem:[%s1 + $0x88] sm:$0xff]
        %v666 = vld [vmem:[%s1 + $0x90] sm:$0xff]
        %v667 = vld [vmem:[%s1 + $0x98] sm:$0xff]
        %v668 = vld [vmem:[%s1 + $0xa0] sm:$0xff]
        %v669 = vld [vmem:[%s1 + $0xa8] sm:$0xff]
        %v670 = vld [vmem:[%s1 + $0xb0] sm:$0xff]
        %v671 = vld [vmem:[%s1 + $0xb8] sm:$0xff]
        %v672 = vld [vmem:[%s1 + $0xc0] sm:$0xff]
        %v673 = vld [vmem:[%s1 + $0xc8] sm:$0xff]
        %v674 = vld [vmem:[%s1 + $0xd0] sm:$0xff]
        %v675 = vld [vmem:[%s1 + $0xd8] sm:$0xff]
        %v676 = vld [vmem:[%s1 + $0xe0] sm:$0xff]
        %v677 = vld [vmem:[%s1 + $0xe8] sm:$0xff]
        %v678 = vld [vmem:[%s1 + $0xf0] sm:$0xff]
        %v679 = vld [vmem:[%s1 + $0xf8] sm:$0xff]
        %v680 = vld [vmem:[%s1 + $0x100] sm:$0xff]
        %v681 = vld [vmem:[%s1 + $0x108] sm:$0xff]
        %v682 = vld [vmem:[%s1 + $0x110] sm:$0xff]
        %v683 = vld [vmem:[%s1 + $0x118] sm:$0xff]
        %v684 = vld [vmem:[%s1 + $0x120] sm:$0xff]
        %v685 = vld [vmem:[%s1 + $0x128] sm:$0xff]
        %v686 = vld [vmem:[%s1 + $0x130] sm:$0xff]
        %v687 = vld [vmem:[%s1 + $0x138] sm:$0xff]
        %v688 = vld [vmem:[%s1 + $0x140] sm:$0xff]
        %v689 = vld [vmem:[%s1 + $0x148] sm:$0xff]
        %v690 = vld [vmem:[%s1 + $0x150] sm:$0xff]
        %v691 = vld [vmem:[%s1 + $0x158] sm:$0xff]
        %v692 = vld [vmem:[%s1 + $0x160] sm:$0xff]
        %v693 = vld [vmem:[%s1 + $0x168] sm:$0xff]
        %v694 = vld [vmem:[%s1 + $0x170] sm:$0xff]
        %v695 = vld [vmem:[%s1 + $0x178] sm:$0xff]
        %v696 = vld [vmem:[%s1 + $0x180] sm:$0xff]
        %v697 = vld [vmem:[%s1 + $0x188] sm:$0xff]
        %v698 = vld [vmem:[%s1 + $0x190] sm:$0xff]
        %v699 = vld [vmem:[%s1 + $0x198] sm:$0xff]
        %v700 = vld [vmem:[%s1 + $0x1a0] sm:$0xff]
        %v701 = vld [vmem:[%s1 + $0x1a8] sm:$0xff]
        %v702 = vld [vmem:[%s1 + $0x1b0] sm:$0xff]
        %v703 = vld [vmem:[%s1 + $0x1b8] sm:$0xff]
        %v704 = vld [vmem:[%s1 + $0x1c0] sm:$0xff]
        %v705 = vld [vmem:[%s1 + $0x1c8] sm:$0xff]
        %v706 = vld [vmem:[%s1 + $0x1d0] sm:$0xff]
        %v707 = vld [vmem:[%s1 + $0x1d8] sm:$0xff]
        %v708 = vld [vmem:[%s1 + $0x1e0] sm:$0xff]
        %v709 = vld [vmem:[%s1 + $0x1e8] sm:$0xff]
        %v710 = vld [vmem:[%s1 + $0x1f0] sm:$0xff]
        %v711 = vld [vmem:[%s1 + $0x1f8] sm:$0xff]
        %v712 = vld [vmem:[%s1 + $0x200] sm:$0xff]
        %v713 = vld [vmem:[%s1 + $0x208] sm:$0xff]
        %v714 = vld [vmem:[%s1 + $0x210] sm:$0xff]
        %v715 = vld [vmem:[%s1 + $0x218] sm:$0xff]
        %v716 = vld [vmem:[%s1 + $0x220] sm:$0xff]
        %v717 = vld [vmem:[%s1 + $0x228] sm:$0xff]
        %v718 = vld [vmem:[%s1 + $0x230] sm:$0xff]
        %v719 = vld [vmem:[%s1 + $0x238] sm:$0xff]
        %v720 = vld [vmem:[%s1 + $0x240] sm:$0xff]
        %v721 = vld [vmem:[%s1 + $0x248] sm:$0xff]
        %v722 = vld [vmem:[%s1 + $0x250] sm:$0xff]
        %v723 = vld [vmem:[%s1 + $0x258] sm:$0xff]
        %v724 = vld [vmem:[%s1 + $0x260] sm:$0xff]
        %v725 = vld [vmem:[%s1 + $0x268] sm:$0xff]
        %v726 = vld [vmem:[%s1 + $0x270] sm:$0xff]
        %v727 = vld [vmem:[%s1 + $0x278] sm:$0xff]
        %v728 = vld [vmem:[%s1 + $0x280] sm:$0xff]
        %v729 = vld [vmem:[%s1 + $0x288] sm:$0xff]
        %v730 = vld [vmem:[%s1 + $0x290] sm:$0xff]
        %v731 = vld [vmem:[%s1 + $0x298] sm:$0xff]
        %v732 = vld [vmem:[%s1 + $0x2a0] sm:$0xff]
        %v733 = vld [vmem:[%s1 + $0x2a8] sm:$0xff]
        %v734 = vld [vmem:[%s1 + $0x2b0] sm:$0xff]
        %v735 = vld [vmem:[%s1 + $0x2b8] sm:$0xff]
        %v736 = vld [vmem:[%s1 + $0x2c0] sm:$0xff]
        %v737 = vld [vmem:[%s1 + $0x2c8] sm:$0xff]
        %v738 = vld [vmem:[%s1 + $0x2d0] sm:$0xff]
        %v739 = vld [vmem:[%s1 + $0x2d8] sm:$0xff]
        %v740 = vld [vmem:[%s1 + $0x2e0] sm:$0xff]
        %v741 = vld [vmem:[%s1 + $0x2e8] sm:$0xff]
        %v742 = vld [vmem:[%s1 + $0x2f0] sm:$0xff]
        %v743 = vld [vmem:[%s1 + $0x2f8] sm:$0xff]
        %v744 = vld [vmem:[%s1 + $0x300] sm:$0xff]
        %v745 = vld [vmem:[%s1 + $0x308] sm:$0xff]
        %v746 = vld [vmem:[%s1 + $0x310] sm:$0xff]
        %v747 = vld [vmem:[%s1 + $0x318] sm:$0xff]
        %v748 = vld [vmem:[%s1 + $0x320] sm:$0xff]
        %v749 = vld [vmem:[%s1 + $0x328] sm:$0xff]
        %v750 = vld [vmem:[%s1 + $0x330] sm:$0xff]
        %v751 = vld [vmem:[%s1 + $0x338] sm:$0xff]
        %v752 = vld [vmem:[%s1 + $0x340] sm:$0xff]
        %v753 = vld [vmem:[%s1 + $0x348] sm:$0xff]
        %v754 = vld [vmem:[%s1 + $0x350] sm:$0xff]
        %v755 = vld [vmem:[%s1 + $0x358] sm:$0xff]
        %v756 = vld [vmem:[%s1 + $0x360] sm:$0xff]
        %v757 = vld [vmem:[%s1 + $0x368] sm:$0xff]
        %v758 = vld [vmem:[%s1 + $0x370] sm:$0xff]
        %v759 = vld [vmem:[%s1 + $0x378] sm:$0xff]
        %v760 = vld [vmem:[%s1 + $0x380] sm:$0xff]
        %v761 = vld [vmem:[%s1 + $0x388] sm:$0xff]
        %v762 = vld [vmem:[%s1 + $0x390] sm:$0xff]
        %v763 = vld [vmem:[%s1 + $0x398] sm:$0xff]
        %v764 = vld [vmem:[%s1 + $0x3a0] sm:$0xff]
        %v765 = vld [vmem:[%s1 + $0x3a8] sm:$0xff]
        %v766 = vld [vmem:[%s1 + $0x3b0] sm:$0xff]
        %v767 = vld [vmem:[%s1 + $0x3b8] sm:$0xff]
        %v768 = vld [vmem:[%s1 + $0x3c0] sm:$0xff]
        %v769 = vld [vmem:[%s1 + $0x3c8] sm:$0xff]
        %v770 = vld [vmem:[%s1 + $0x3d0] sm:$0xff]
        %v771 = vld [vmem:[%s1 + $0x3d8] sm:$0xff]
        %v772 = vld [vmem:[%s1 + $0x3e0] sm:$0xff]
        %v773 = vld [vmem:[%s1 + $0x3e8] sm:$0xff]
        %v774 = vld [vmem:[%s1 + $0x3f0] sm:$0xff]
        %v775 = vld [vmem:[%s1 + $0x3f8] sm:$0xff]
        %v776 = vld [vmem:[#allocation5] sm:$0x3]
        %v778 = vlaneseq
        %v779 = vshrl.u32 %v778, 7
        %v780 = vsub.s32 0, %v779
        %v781 = vrot.slane %v776, %v780
        %v782 = vlaneseq
        %v783 = vshrl.u32 %v782, 7
        %v784 = vsub.s32 1, %v783
        %v785 = vrot.slane %v776, %v784
        %v916 = vunpack.c.l.b16 %v648
        %v917 = vunpack.c.h.b16 %v648
        %v918 = vunpack.c.l.b16 %v649
        %v919 = vunpack.c.h.b16 %v649
        %v920 = vunpack.c.l.b16 %v650
        %v921 = vunpack.c.h.b16 %v650
        %v922 = vunpack.c.l.b16 %v651
        %v923 = vunpack.c.h.b16 %v651
        %v924 = vunpack.c.l.b16 %v652
        %v925 = vunpack.c.h.b16 %v652
        %v926 = vunpack.c.l.b16 %v653
        %v927 = vunpack.c.h.b16 %v653
        %v928 = vunpack.c.l.b16 %v654
        %v929 = vunpack.c.h.b16 %v654
        %v930 = vunpack.c.l.b16 %v655
        %v931 = vunpack.c.h.b16 %v655
        %v932 = vunpack.c.l.b16 %v656
        %v933 = vunpack.c.h.b16 %v656
        %v934 = vunpack.c.l.b16 %v657
        %v935 = vunpack.c.h.b16 %v657
        %v936 = vunpack.c.l.b16 %v658
        %v937 = vunpack.c.h.b16 %v658
        %v938 = vunpack.c.l.b16 %v659
        %v939 = vunpack.c.h.b16 %v659
        %v940 = vunpack.c.l.b16 %v660
        %v941 = vunpack.c.h.b16 %v660
        %v942 = vunpack.c.l.b16 %v661
        %v943 = vunpack.c.h.b16 %v661
        %v944 = vunpack.c.l.b16 %v662
        %v945 = vunpack.c.h.b16 %v662
        %v946 = vunpack.c.l.b16 %v663
        %v947 = vunpack.c.h.b16 %v663
        %v948 = vunpack.c.l.b16 %v664
        %v949 = vunpack.c.h.b16 %v664
        %v950 = vunpack.c.l.b16 %v665
        %v951 = vunpack.c.h.b16 %v665
        %v952 = vunpack.c.l.b16 %v666
        %v953 = vunpack.c.h.b16 %v666
        %v954 = vunpack.c.l.b16 %v667
        %v955 = vunpack.c.h.b16 %v667
        %v956 = vunpack.c.l.b16 %v668
        %v957 = vunpack.c.h.b16 %v668
        %v958 = vunpack.c.l.b16 %v669
        %v959 = vunpack.c.h.b16 %v669
        %v960 = vunpack.c.l.b16 %v670
        %v961 = vunpack.c.h.b16 %v670
        %v962 = vunpack.c.l.b16 %v671
        %v963 = vunpack.c.h.b16 %v671
        %v964 = vunpack.c.l.b16 %v672
        %v965 = vunpack.c.h.b16 %v672
        %v966 = vunpack.c.l.b16 %v673
        %v967 = vunpack.c.h.b16 %v673
        %v968 = vunpack.c.l.b16 %v674
        %v969 = vunpack.c.h.b16 %v674
        %v970 = vunpack.c.l.b16 %v675
        %v971 = vunpack.c.h.b16 %v675
        %v972 = vunpack.c.l.b16 %v676
        %v973 = vunpack.c.h.b16 %v676
        %v974 = vunpack.c.l.b16 %v677
        %v975 = vunpack.c.h.b16 %v677
        %v976 = vunpack.c.l.b16 %v678
        %v977 = vunpack.c.h.b16 %v678
        %v978 = vunpack.c.l.b16 %v679
        %v979 = vunpack.c.h.b16 %v679
        %v980 = vunpack.c.l.b16 %v680
        %v981 = vunpack.c.h.b16 %v680
        %v982 = vunpack.c.l.b16 %v681
        %v983 = vunpack.c.h.b16 %v681
        %v984 = vunpack.c.l.b16 %v682
        %v985 = vunpack.c.h.b16 %v682
        %v986 = vunpack.c.l.b16 %v683
        %v987 = vunpack.c.h.b16 %v683
        %v988 = vunpack.c.l.b16 %v684
        %v989 = vunpack.c.h.b16 %v684
        %v990 = vunpack.c.l.b16 %v685
        %v991 = vunpack.c.h.b16 %v685
        %v992 = vunpack.c.l.b16 %v686
        %v993 = vunpack.c.h.b16 %v686
        %v994 = vunpack.c.l.b16 %v687
        %v995 = vunpack.c.h.b16 %v687
        %v996 = vunpack.c.l.b16 %v688
        %v997 = vunpack.c.h.b16 %v688
        %v998 = vunpack.c.l.b16 %v689
        %v999 = vunpack.c.h.b16 %v689
        %v1000 = vunpack.c.l.b16 %v690
        %v1001 = vunpack.c.h.b16 %v690
        %v1002 = vunpack.c.l.b16 %v691
        %v1003 = vunpack.c.h.b16 %v691
        %v1004 = vunpack.c.l.b16 %v692
        %v1005 = vunpack.c.h.b16 %v692
        %v1006 = vunpack.c.l.b16 %v693
        %v1007 = vunpack.c.h.b16 %v693
        %v1008 = vunpack.c.l.b16 %v694
        %v1009 = vunpack.c.h.b16 %v694
        %v1010 = vunpack.c.l.b16 %v695
        %v1011 = vunpack.c.h.b16 %v695
        %v1012 = vunpack.c.l.b16 %v696
        %v1013 = vunpack.c.h.b16 %v696
        %v1014 = vunpack.c.l.b16 %v697
        %v1015 = vunpack.c.h.b16 %v697
        %v1016 = vunpack.c.l.b16 %v698
        %v1017 = vunpack.c.h.b16 %v698
        %v1018 = vunpack.c.l.b16 %v699
        %v1019 = vunpack.c.h.b16 %v699
        %v1020 = vunpack.c.l.b16 %v700
        %v1021 = vunpack.c.h.b16 %v700
        %v1022 = vunpack.c.l.b16 %v701
        %v1023 = vunpack.c.h.b16 %v701
        %v1024 = vunpack.c.l.b16 %v702
        %v1025 = vunpack.c.h.b16 %v702
        %v1026 = vunpack.c.l.b16 %v703
        %v1027 = vunpack.c.h.b16 %v703
        %v1028 = vunpack.c.l.b16 %v704
        %v1029 = vunpack.c.h.b16 %v704
        %v1030 = vunpack.c.l.b16 %v705
        %v1031 = vunpack.c.h.b16 %v705
        %v1032 = vunpack.c.l.b16 %v706
        %v1033 = vunpack.c.h.b16 %v706
        %v1034 = vunpack.c.l.b16 %v707
        %v1035 = vunpack.c.h.b16 %v707
        %v1036 = vunpack.c.l.b16 %v708
        %v1037 = vunpack.c.h.b16 %v708
        %v1038 = vunpack.c.l.b16 %v709
        %v1039 = vunpack.c.h.b16 %v709
        %v1040 = vunpack.c.l.b16 %v710
        %v1041 = vunpack.c.h.b16 %v710
        %v1042 = vunpack.c.l.b16 %v711
        %v1043 = vunpack.c.h.b16 %v711
        %v1044 = vunpack.c.l.b16 %v712
        %v1045 = vunpack.c.h.b16 %v712
        %v1046 = vunpack.c.l.b16 %v713
        %v1047 = vunpack.c.h.b16 %v713
        %v1048 = vunpack.c.l.b16 %v714
        %v1049 = vunpack.c.h.b16 %v714
        %v1050 = vunpack.c.l.b16 %v715
        %v1051 = vunpack.c.h.b16 %v715
        %v1052 = vunpack.c.l.b16 %v716
        %v1053 = vunpack.c.h.b16 %v716
        %v1054 = vunpack.c.l.b16 %v717
        %v1055 = vunpack.c.h.b16 %v717
        %v1056 = vunpack.c.l.b16 %v718
        %v1057 = vunpack.c.h.b16 %v718
        %v1058 = vunpack.c.l.b16 %v719
        %v1059 = vunpack.c.h.b16 %v719
        %v1060 = vunpack.c.l.b16 %v720
        %v1061 = vunpack.c.h.b16 %v720
        %v1062 = vunpack.c.l.b16 %v721
        %v1063 = vunpack.c.h.b16 %v721
        %v1064 = vunpack.c.l.b16 %v722
        %v1065 = vunpack.c.h.b16 %v722
        %v1066 = vunpack.c.l.b16 %v723
        %v1067 = vunpack.c.h.b16 %v723
        %v1068 = vunpack.c.l.b16 %v724
        %v1069 = vunpack.c.h.b16 %v724
        %v1070 = vunpack.c.l.b16 %v725
        %v1071 = vunpack.c.h.b16 %v725
        %v1072 = vunpack.c.l.b16 %v726
        %v1073 = vunpack.c.h.b16 %v726
        %v1074 = vunpack.c.l.b16 %v727
        %v1075 = vunpack.c.h.b16 %v727
        %v1076 = vunpack.c.l.b16 %v728
        %v1077 = vunpack.c.h.b16 %v728
        %v1078 = vunpack.c.l.b16 %v729
        %v1079 = vunpack.c.h.b16 %v729
        %v1080 = vunpack.c.l.b16 %v730
        %v1081 = vunpack.c.h.b16 %v730
        %v1082 = vunpack.c.l.b16 %v731
        %v1083 = vunpack.c.h.b16 %v731
        %v1084 = vunpack.c.l.b16 %v732
        %v1085 = vunpack.c.h.b16 %v732
        %v1086 = vunpack.c.l.b16 %v733
        %v1087 = vunpack.c.h.b16 %v733
        %v1088 = vunpack.c.l.b16 %v734
        %v1089 = vunpack.c.h.b16 %v734
        %v1090 = vunpack.c.l.b16 %v735
        %v1091 = vunpack.c.h.b16 %v735
        %v1092 = vunpack.c.l.b16 %v736
        %v1093 = vunpack.c.h.b16 %v736
        %v1094 = vunpack.c.l.b16 %v737
        %v1095 = vunpack.c.h.b16 %v737
        %v1096 = vunpack.c.l.b16 %v738
        %v1097 = vunpack.c.h.b16 %v738
        %v1098 = vunpack.c.l.b16 %v739
        %v1099 = vunpack.c.h.b16 %v739
        %v1100 = vunpack.c.l.b16 %v740
        %v1101 = vunpack.c.h.b16 %v740
        %v1102 = vunpack.c.l.b16 %v741
        %v1103 = vunpack.c.h.b16 %v741
        %v1104 = vunpack.c.l.b16 %v742
        %v1105 = vunpack.c.h.b16 %v742
        %v1106 = vunpack.c.l.b16 %v743
        %v1107 = vunpack.c.h.b16 %v743
        %v1108 = vunpack.c.l.b16 %v744
        %v1109 = vunpack.c.h.b16 %v744
        %v1110 = vunpack.c.l.b16 %v745
        %v1111 = vunpack.c.h.b16 %v745
        %v1112 = vunpack.c.l.b16 %v746
        %v1113 = vunpack.c.h.b16 %v746
        %v1114 = vunpack.c.l.b16 %v747
        %v1115 = vunpack.c.h.b16 %v747
        %v1116 = vunpack.c.l.b16 %v748
        %v1117 = vunpack.c.h.b16 %v748
        %v1118 = vunpack.c.l.b16 %v749
        %v1119 = vunpack.c.h.b16 %v749
        %v1120 = vunpack.c.l.b16 %v750
        %v1121 = vunpack.c.h.b16 %v750
        %v1122 = vunpack.c.l.b16 %v751
        %v1123 = vunpack.c.h.b16 %v751
        %v1124 = vunpack.c.l.b16 %v752
        %v1125 = vunpack.c.h.b16 %v752
        %v1126 = vunpack.c.l.b16 %v753
        %v1127 = vunpack.c.h.b16 %v753
        %v1128 = vunpack.c.l.b16 %v754
        %v1129 = vunpack.c.h.b16 %v754
        %v1130 = vunpack.c.l.b16 %v755
        %v1131 = vunpack.c.h.b16 %v755
        %v1132 = vunpack.c.l.b16 %v756
        %v1133 = vunpack.c.h.b16 %v756
        %v1134 = vunpack.c.l.b16 %v757
        %v1135 = vunpack.c.h.b16 %v757
        %v1136 = vunpack.c.l.b16 %v758
        %v1137 = vunpack.c.h.b16 %v758
        %v1138 = vunpack.c.l.b16 %v759
        %v1139 = vunpack.c.h.b16 %v759
        %v1140 = vunpack.c.l.b16 %v760
        %v1141 = vunpack.c.h.b16 %v760
        %v1142 = vunpack.c.l.b16 %v761
        %v1143 = vunpack.c.h.b16 %v761
        %v1144 = vunpack.c.l.b16 %v762
        %v1145 = vunpack.c.h.b16 %v762
        %v1146 = vunpack.c.l.b16 %v763
        %v1147 = vunpack.c.h.b16 %v763
        %v1148 = vunpack.c.l.b16 %v764
        %v1149 = vunpack.c.h.b16 %v764
        %v1150 = vunpack.c.l.b16 %v765
        %v1151 = vunpack.c.h.b16 %v765
        %v1152 = vunpack.c.l.b16 %v766
        %v1153 = vunpack.c.h.b16 %v766
        %v1154 = vunpack.c.l.b16 %v767
        %v1155 = vunpack.c.h.b16 %v767
        %v1156 = vunpack.c.l.b16 %v768
        %v1157 = vunpack.c.h.b16 %v768
        %v1158 = vunpack.c.l.b16 %v769
        %v1159 = vunpack.c.h.b16 %v769
        %v1160 = vunpack.c.l.b16 %v770
        %v1161 = vunpack.c.h.b16 %v770
        %v1162 = vunpack.c.l.b16 %v771
        %v1163 = vunpack.c.h.b16 %v771
        %v1164 = vunpack.c.l.b16 %v772
        %v1165 = vunpack.c.h.b16 %v772
        %v1166 = vunpack.c.l.b16 %v773
        %v1167 = vunpack.c.h.b16 %v773
        %v1168 = vunpack.c.l.b16 %v774
        %v1169 = vunpack.c.h.b16 %v774
        %v1170 = vunpack.c.l.b16 %v775
        %v1171 = vunpack.c.h.b16 %v775
        %v1172 = vpack.c.b16 %v918, %v916
        %v1173 = vpack.c.b16 %v919, %v917
        %v1174 = vpack.c.b16 %v922, %v920
        %v1175 = vpack.c.b16 %v923, %v921
        %v1176 = vpack.c.b16 %v926, %v924
        %v1177 = vpack.c.b16 %v927, %v925
        %v1178 = vpack.c.b16 %v930, %v928
        %v1179 = vpack.c.b16 %v931, %v929
        %v1180 = vpack.c.b16 %v934, %v932
        %v1181 = vpack.c.b16 %v935, %v933
        %v1182 = vpack.c.b16 %v938, %v936
        %v1183 = vpack.c.b16 %v939, %v937
        %v1184 = vpack.c.b16 %v942, %v940
        %v1185 = vpack.c.b16 %v943, %v941
        %v1186 = vpack.c.b16 %v946, %v944
        %v1187 = vpack.c.b16 %v947, %v945
        %v1188 = vpack.c.b16 %v950, %v948
        %v1189 = vpack.c.b16 %v951, %v949
        %v1190 = vpack.c.b16 %v954, %v952
        %v1191 = vpack.c.b16 %v955, %v953
        %v1192 = vpack.c.b16 %v958, %v956
        %v1193 = vpack.c.b16 %v959, %v957
        %v1194 = vpack.c.b16 %v962, %v960
        %v1195 = vpack.c.b16 %v963, %v961
        %v1196 = vpack.c.b16 %v966, %v964
        %v1197 = vpack.c.b16 %v967, %v965
        %v1198 = vpack.c.b16 %v970, %v968
        %v1199 = vpack.c.b16 %v971, %v969
        %v1200 = vpack.c.b16 %v974, %v972
        %v1201 = vpack.c.b16 %v975, %v973
        %v1202 = vpack.c.b16 %v978, %v976
        %v1203 = vpack.c.b16 %v979, %v977
        %v1204 = vpack.c.b16 %v982, %v980
        %v1205 = vpack.c.b16 %v983, %v981
        %v1206 = vpack.c.b16 %v986, %v984
        %v1207 = vpack.c.b16 %v987, %v985
        %v1208 = vpack.c.b16 %v990, %v988
        %v1209 = vpack.c.b16 %v991, %v989
        %v1210 = vpack.c.b16 %v994, %v992
        %v1211 = vpack.c.b16 %v995, %v993
        %v1212 = vpack.c.b16 %v998, %v996
        %v1213 = vpack.c.b16 %v999, %v997
        %v1214 = vpack.c.b16 %v1002, %v1000
        %v1215 = vpack.c.b16 %v1003, %v1001
        %v1216 = vpack.c.b16 %v1006, %v1004
        %v1217 = vpack.c.b16 %v1007, %v1005
        %v1218 = vpack.c.b16 %v1010, %v1008
        %v1219 = vpack.c.b16 %v1011, %v1009
        %v1220 = vpack.c.b16 %v1014, %v1012
        %v1221 = vpack.c.b16 %v1015, %v1013
        %v1222 = vpack.c.b16 %v1018, %v1016
        %v1223 = vpack.c.b16 %v1019, %v1017
        %v1224 = vpack.c.b16 %v1022, %v1020
        %v1225 = vpack.c.b16 %v1023, %v1021
        %v1226 = vpack.c.b16 %v1026, %v1024
        %v1227 = vpack.c.b16 %v1027, %v1025
        %v1228 = vpack.c.b16 %v1030, %v1028
        %v1229 = vpack.c.b16 %v1031, %v1029
        %v1230 = vpack.c.b16 %v1034, %v1032
        %v1231 = vpack.c.b16 %v1035, %v1033
        %v1232 = vpack.c.b16 %v1038, %v1036
        %v1233 = vpack.c.b16 %v1039, %v1037
        %v1234 = vpack.c.b16 %v1042, %v1040
        %v1235 = vpack.c.b16 %v1043, %v1041
        %v1236 = vpack.c.b16 %v1046, %v1044
        %v1237 = vpack.c.b16 %v1047, %v1045
        %v1238 = vpack.c.b16 %v1050, %v1048
        %v1239 = vpack.c.b16 %v1051, %v1049
        %v1240 = vpack.c.b16 %v1054, %v1052
        %v1241 = vpack.c.b16 %v1055, %v1053
        %v1242 = vpack.c.b16 %v1058, %v1056
        %v1243 = vpack.c.b16 %v1059, %v1057
        %v1244 = vpack.c.b16 %v1062, %v1060
        %v1245 = vpack.c.b16 %v1063, %v1061
        %v1246 = vpack.c.b16 %v1066, %v1064
        %v1247 = vpack.c.b16 %v1067, %v1065
        %v1248 = vpack.c.b16 %v1070, %v1068
        %v1249 = vpack.c.b16 %v1071, %v1069
        %v1250 = vpack.c.b16 %v1074, %v1072
        %v1251 = vpack.c.b16 %v1075, %v1073
        %v1252 = vpack.c.b16 %v1078, %v1076
        %v1253 = vpack.c.b16 %v1079, %v1077
        %v1254 = vpack.c.b16 %v1082, %v1080
        %v1255 = vpack.c.b16 %v1083, %v1081
        %v1256 = vpack.c.b16 %v1086, %v1084
        %v1257 = vpack.c.b16 %v1087, %v1085
        %v1258 = vpack.c.b16 %v1090, %v1088
        %v1259 = vpack.c.b16 %v1091, %v1089
        %v1260 = vpack.c.b16 %v1094, %v1092
        %v1261 = vpack.c.b16 %v1095, %v1093
        %v1262 = vpack.c.b16 %v1098, %v1096
        %v1263 = vpack.c.b16 %v1099, %v1097
        %v1264 = vpack.c.b16 %v1102, %v1100
        %v1265 = vpack.c.b16 %v1103, %v1101
        %v1266 = vpack.c.b16 %v1106, %v1104
        %v1267 = vpack.c.b16 %v1107, %v1105
        %v1268 = vpack.c.b16 %v1110, %v1108
        %v1269 = vpack.c.b16 %v1111, %v1109
        %v1270 = vpack.c.b16 %v1114, %v1112
        %v1271 = vpack.c.b16 %v1115, %v1113
        %v1272 = vpack.c.b16 %v1118, %v1116
        %v1273 = vpack.c.b16 %v1119, %v1117
        %v1274 = vpack.c.b16 %v1122, %v1120
        %v1275 = vpack.c.b16 %v1123, %v1121
        %v1276 = vpack.c.b16 %v1126, %v1124
        %v1277 = vpack.c.b16 %v1127, %v1125
        %v1278 = vpack.c.b16 %v1130, %v1128
        %v1279 = vpack.c.b16 %v1131, %v1129
        %v1280 = vpack.c.b16 %v1134, %v1132
        %v1281 = vpack.c.b16 %v1135, %v1133
        %v1282 = vpack.c.b16 %v1138, %v1136
        %v1283 = vpack.c.b16 %v1139, %v1137
        %v1284 = vpack.c.b16 %v1142, %v1140
        %v1285 = vpack.c.b16 %v1143, %v1141
        %v1286 = vpack.c.b16 %v1146, %v1144
        %v1287 = vpack.c.b16 %v1147, %v1145
        %v1288 = vpack.c.b16 %v1150, %v1148
        %v1289 = vpack.c.b16 %v1151, %v1149
        %v1290 = vpack.c.b16 %v1154, %v1152
        %v1291 = vpack.c.b16 %v1155, %v1153
        %v1292 = vpack.c.b16 %v1158, %v1156
        %v1293 = vpack.c.b16 %v1159, %v1157
        %v1294 = vpack.c.b16 %v1162, %v1160
        %v1295 = vpack.c.b16 %v1163, %v1161
        %v1296 = vpack.c.b16 %v1166, %v1164
        %v1297 = vpack.c.b16 %v1167, %v1165
        %v1298 = vpack.c.b16 %v1170, %v1168
        %v1299 = vpack.c.b16 %v1171, %v1169
        %1428 = vmatprep.subr.bf16.mxu0 %v1187
        %1429 = vmatpush1.bf16.msra.mxu0 %v1186
        %1430 = vmatprep.subr.bf16.mxu0 %v1185
        %1431 = vmatpush1.bf16.msra.mxu0 %v1184
        %1432 = vmatprep.subr.bf16.mxu0 %v1183
        %1433 = vmatpush1.bf16.msra.mxu0 %v1182
        %1434 = vmatprep.subr.bf16.mxu0 %v1181
        %1435 = vmatpush1.bf16.msra.mxu0 %v1180
        %1436 = vmatprep.subr.bf16.mxu0 %v1179
        %1437 = vmatpush1.bf16.msra.mxu0 %v1178
        %1438 = vmatprep.subr.bf16.mxu0 %v1177
        %1439 = vmatpush1.bf16.msra.mxu0 %v1176
        %1440 = vmatprep.subr.bf16.mxu0 %v1175
        %1441 = vmatpush1.bf16.msra.mxu0 %v1174
        %1442 = vmatprep.subr.bf16.mxu0 %v1173
        %1443 = vmatpush1.bf16.msra.mxu0 %v1172
        %1444 = vmatprep.subr.bf16.mxu0 %v1203
        %1445 = vmatpush2.bf16.msra.mxu0 %v1202
        %1446 = vmatprep.subr.bf16.mxu0 %v1201
        %1447 = vmatpush2.bf16.msra.mxu0 %v1200
        %1448 = vmatprep.subr.bf16.mxu0 %v1199
        %1449 = vmatpush2.bf16.msra.mxu0 %v1198
        %1450 = vmatprep.subr.bf16.mxu0 %v1197
        %1451 = vmatpush2.bf16.msra.mxu0 %v1196
        %1452 = vmatprep.subr.bf16.mxu0 %v1195
        %1453 = vmatpush2.bf16.msra.mxu0 %v1194
        %1454 = vmatprep.subr.bf16.mxu0 %v1193
        %1455 = vmatpush2.bf16.msra.mxu0 %v1192
        %1456 = vmatprep.subr.bf16.mxu0 %v1191
        %1457 = vmatpush2.bf16.msra.mxu0 %v1190
        %1458 = vmatprep.subr.bf16.mxu0 %v1189
        %1459 = vmatpush2.bf16.msra.mxu0 %v1188
        %1460 = vmatprep.mubr.bf16.mxu0 %v521
        %1461 = vmatmul.mubr.bf16.gmra.mxu0 %v520
        %v1462 = vpop.f32.mrf.mxu0
        %v1463 = vadd.f32 %v781, %v1462
        %v1464 = vpop.f32.mrf.mxu0
        %v1465 = vadd.f32 %v785, %v1464
        %v1466 = vpop.f32.mrf.mxu0
        %v1467 = vadd.f32 %v781, %v1466
        %v1468 = vpop.f32.mrf.mxu0
        %v1469 = vadd.f32 %v785, %v1468
        %1470 = vmatprep.mubr.bf16.mxu0 %v529
        %1471 = vmatmul.mubr.bf16.gmra.mxu0 %v528
        %v1472 = vpop.f32.mrf.mxu0
        %v1473 = vadd.f32 %v781, %v1472
        %v1474 = vpop.f32.mrf.mxu0
        %v1475 = vadd.f32 %v785, %v1474
        %v1476 = vpop.f32.mrf.mxu0
        %v1477 = vadd.f32 %v781, %v1476
        %v1478 = vpop.f32.mrf.mxu0
        %v1479 = vadd.f32 %v785, %v1478
        %1480 = vmatprep.mubr.bf16.mxu0 %v537
        %1481 = vmatmul.mubr.bf16.gmra.mxu0 %v536
        %v1482 = vpop.f32.mrf.mxu0
        %v1483 = vadd.f32 %v781, %v1482
        %v1484 = vpop.f32.mrf.mxu0
        %v1485 = vadd.f32 %v785, %v1484
        %v1486 = vpop.f32.mrf.mxu0
        %v1487 = vadd.f32 %v781, %v1486
        %v1488 = vpop.f32.mrf.mxu0
        %v1489 = vadd.f32 %v785, %v1488
        %1490 = vmatprep.mubr.bf16.mxu0 %v545
        %1491 = vmatmul.mubr.bf16.gmra.mxu0 %v544
        %v1492 = vpop.f32.mrf.mxu0
        %v1493 = vadd.f32 %v781, %v1492
        %v1494 = vpop.f32.mrf.mxu0
        %v1495 = vadd.f32 %v785, %v1494
        %v1496 = vpop.f32.mrf.mxu0
        %v1497 = vadd.f32 %v781, %v1496
        %v1498 = vpop.f32.mrf.mxu0
        %v1499 = vadd.f32 %v785, %v1498
        %1500 = vmatprep.mubr.bf16.mxu0 %v553
        %1501 = vmatmul.mubr.bf16.gmra.mxu0 %v552
        %v1502 = vpop.f32.mrf.mxu0
        %v1503 = vadd.f32 %v781, %v1502
        %v1504 = vpop.f32.mrf.mxu0
        %v1505 = vadd.f32 %v785, %v1504
        %v1506 = vpop.f32.mrf.mxu0
        %v1507 = vadd.f32 %v781, %v1506
        %v1508 = vpop.f32.mrf.mxu0
        %v1509 = vadd.f32 %v785, %v1508
        %1510 = vmatprep.mubr.bf16.mxu0 %v561
        %1511 = vmatmul.mubr.bf16.gmra.mxu0 %v560
        %v1512 = vpop.f32.mrf.mxu0
        %v1513 = vadd.f32 %v781, %v1512
        %v1514 = vpop.f32.mrf.mxu0
        %v1515 = vadd.f32 %v785, %v1514
        %v1516 = vpop.f32.mrf.mxu0
        %v1517 = vadd.f32 %v781, %v1516
        %v1518 = vpop.f32.mrf.mxu0
        %v1519 = vadd.f32 %v785, %v1518
        %1520 = vmatprep.mubr.bf16.mxu0 %v569
        %1521 = vmatmul.mubr.bf16.gmra.mxu0 %v568
        %v1522 = vpop.f32.mrf.mxu0
        %v1523 = vadd.f32 %v781, %v1522
        %v1524 = vpop.f32.mrf.mxu0
        %v1525 = vadd.f32 %v785, %v1524
        %v1526 = vpop.f32.mrf.mxu0
        %v1527 = vadd.f32 %v781, %v1526
        %v1528 = vpop.f32.mrf.mxu0
        %v1529 = vadd.f32 %v785, %v1528
        %1530 = vmatprep.mubr.bf16.mxu0 %v577
        %1531 = vmatmul.mubr.bf16.gmra.mxu0 %v576
        %v1532 = vpop.f32.mrf.mxu0
        %v1533 = vadd.f32 %v781, %v1532
        %v1534 = vpop.f32.mrf.mxu0
        %v1535 = vadd.f32 %v785, %v1534
        %v1536 = vpop.f32.mrf.mxu0
        %v1537 = vadd.f32 %v781, %v1536
        %v1538 = vpop.f32.mrf.mxu0
        %v1539 = vadd.f32 %v785, %v1538
        %1540 = vmatprep.mubr.bf16.mxu0 %v585
        %1541 = vmatmul.mubr.bf16.gmra.mxu0 %v584
        %v1542 = vpop.f32.mrf.mxu0
        %v1543 = vadd.f32 %v781, %v1542
        %v1544 = vpop.f32.mrf.mxu0
        %v1545 = vadd.f32 %v785, %v1544
        %v1546 = vpop.f32.mrf.mxu0
        %v1547 = vadd.f32 %v781, %v1546
        %v1548 = vpop.f32.mrf.mxu0
        %v1549 = vadd.f32 %v785, %v1548
        %1550 = vmatprep.mubr.bf16.mxu0 %v593
        %1551 = vmatmul.mubr.bf16.gmra.mxu0 %v592
        %v1552 = vpop.f32.mrf.mxu0
        %v1553 = vadd.f32 %v781, %v1552
        %v1554 = vpop.f32.mrf.mxu0
        %v1555 = vadd.f32 %v785, %v1554
        %v1556 = vpop.f32.mrf.mxu0
        %v1557 = vadd.f32 %v781, %v1556
        %v1558 = vpop.f32.mrf.mxu0
        %v1559 = vadd.f32 %v785, %v1558
        %1560 = vmatprep.mubr.bf16.mxu0 %v601
        %1561 = vmatmul.mubr.bf16.gmra.mxu0 %v600
        %v1562 = vpop.f32.mrf.mxu0
        %v1563 = vadd.f32 %v781, %v1562
        %v1564 = vpop.f32.mrf.mxu0
        %v1565 = vadd.f32 %v785, %v1564
        %v1566 = vpop.f32.mrf.mxu0
        %v1567 = vadd.f32 %v781, %v1566
        %v1568 = vpop.f32.mrf.mxu0
        %v1569 = vadd.f32 %v785, %v1568
        %1570 = vmatprep.mubr.bf16.mxu0 %v609
        %1571 = vmatmul.mubr.bf16.gmra.mxu0 %v608
        %v1572 = vpop.f32.mrf.mxu0
        %v1573 = vadd.f32 %v781, %v1572
        %v1574 = vpop.f32.mrf.mxu0
        %v1575 = vadd.f32 %v785, %v1574
        %v1576 = vpop.f32.mrf.mxu0
        %v1577 = vadd.f32 %v781, %v1576
        %v1578 = vpop.f32.mrf.mxu0
        %v1579 = vadd.f32 %v785, %v1578
        %1580 = vmatprep.mubr.bf16.mxu0 %v617
        %1581 = vmatmul.mubr.bf16.gmra.mxu0 %v616
        %v1582 = vpop.f32.mrf.mxu0
        %v1583 = vadd.f32 %v781, %v1582
        %v1584 = vpop.f32.mrf.mxu0
        %v1585 = vadd.f32 %v785, %v1584
        %v1586 = vpop.f32.mrf.mxu0
        %v1587 = vadd.f32 %v781, %v1586
        %v1588 = vpop.f32.mrf.mxu0
        %v1589 = vadd.f32 %v785, %v1588
        %1590 = vmatprep.mubr.bf16.mxu0 %v625
        %1591 = vmatmul.mubr.bf16.gmra.mxu0 %v624
        %v1592 = vpop.f32.mrf.mxu0
        %v1593 = vadd.f32 %v781, %v1592
        %v1594 = vpop.f32.mrf.mxu0
        %v1595 = vadd.f32 %v785, %v1594
        %v1596 = vpop.f32.mrf.mxu0
        %v1597 = vadd.f32 %v781, %v1596
        %v1598 = vpop.f32.mrf.mxu0
        %v1599 = vadd.f32 %v785, %v1598
        %1600 = vmatprep.mubr.bf16.mxu0 %v633
        %1601 = vmatmul.mubr.bf16.gmra.mxu0 %v632
        %v1602 = vpop.f32.mrf.mxu0
        %v1603 = vadd.f32 %v781, %v1602
        %v1604 = vpop.f32.mrf.mxu0
        %v1605 = vadd.f32 %v785, %v1604
        %v1606 = vpop.f32.mrf.mxu0
        %v1607 = vadd.f32 %v781, %v1606
        %v1608 = vpop.f32.mrf.mxu0
        %v1609 = vadd.f32 %v785, %v1608
        %1610 = vmatprep.mubr.bf16.mxu0 %v641
        %1611 = vmatmul.mubr.bf16.gmra.mxu0 %v640
        %v1612 = vpop.f32.mrf.mxu0
        %v1613 = vadd.f32 %v781, %v1612
        %v1614 = vpop.f32.mrf.mxu0
        %v1615 = vadd.f32 %v785, %v1614
        %v1616 = vpop.f32.mrf.mxu0
        %v1617 = vadd.f32 %v781, %v1616
        %v1618 = vpop.f32.mrf.mxu0
        %v1619 = vadd.f32 %v785, %v1618
        %1620 = vdwg.mxu0
        %1621 = vmatprep.subr.bf16.mxu0 %v1219
        %1622 = vmatpush1.bf16.msra.mxu0 %v1218
        %1623 = vmatprep.subr.bf16.mxu0 %v1217
        %1624 = vmatpush1.bf16.msra.mxu0 %v1216
        %1625 = vmatprep.subr.bf16.mxu0 %v1215
        %1626 = vmatpush1.bf16.msra.mxu0 %v1214
        %1627 = vmatprep.subr.bf16.mxu0 %v1213
        %1628 = vmatpush1.bf16.msra.mxu0 %v1212
        %1629 = vmatprep.subr.bf16.mxu0 %v1211
        %1630 = vmatpush1.bf16.msra.mxu0 %v1210
        %1631 = vmatprep.subr.bf16.mxu0 %v1209
        %1632 = vmatpush1.bf16.msra.mxu0 %v1208
        %1633 = vmatprep.subr.bf16.mxu0 %v1207
        %1634 = vmatpush1.bf16.msra.mxu0 %v1206
        %1635 = vmatprep.subr.bf16.mxu0 %v1205
        %1636 = vmatpush1.bf16.msra.mxu0 %v1204
        %1637 = vmatprep.subr.bf16.mxu0 %v1235
        %1638 = vmatpush2.bf16.msra.mxu0 %v1234
        %1639 = vmatprep.subr.bf16.mxu0 %v1233
        %1640 = vmatpush2.bf16.msra.mxu0 %v1232
        %1641 = vmatprep.subr.bf16.mxu0 %v1231
        %1642 = vmatpush2.bf16.msra.mxu0 %v1230
        %1643 = vmatprep.subr.bf16.mxu0 %v1229
        %1644 = vmatpush2.bf16.msra.mxu0 %v1228
        %1645 = vmatprep.subr.bf16.mxu0 %v1227
        %1646 = vmatpush2.bf16.msra.mxu0 %v1226
        %1647 = vmatprep.subr.bf16.mxu0 %v1225
        %1648 = vmatpush2.bf16.msra.mxu0 %v1224
        %1649 = vmatprep.subr.bf16.mxu0 %v1223
        %1650 = vmatpush2.bf16.msra.mxu0 %v1222
        %1651 = vmatprep.subr.bf16.mxu0 %v1221
        %1652 = vmatpush2.bf16.msra.mxu0 %v1220
        %1653 = vmatprep.mubr.bf16.mxu0 %v523
        %1654 = vmatmul.mubr.bf16.gmra.mxu0 %v522
        %v1655 = vpop.f32.mrf.mxu0
        %v1656 = vadd.f32 %v1463, %v1655
        %v1657 = vpop.f32.mrf.mxu0
        %v1658 = vadd.f32 %v1465, %v1657
        %v1659 = vpop.f32.mrf.mxu0
        %v1660 = vadd.f32 %v1467, %v1659
        %v1661 = vpop.f32.mrf.mxu0
        %v1662 = vadd.f32 %v1469, %v1661
        %1663 = vmatprep.mubr.bf16.mxu0 %v531
        %1664 = vmatmul.mubr.bf16.gmra.mxu0 %v530
        %v1665 = vpop.f32.mrf.mxu0
        %v1666 = vadd.f32 %v1473, %v1665
        %v1667 = vpop.f32.mrf.mxu0
        %v1668 = vadd.f32 %v1475, %v1667
        %v1669 = vpop.f32.mrf.mxu0
        %v1670 = vadd.f32 %v1477, %v1669
        %v1671 = vpop.f32.mrf.mxu0
        %v1672 = vadd.f32 %v1479, %v1671
        %1673 = vmatprep.mubr.bf16.mxu0 %v539
        %1674 = vmatmul.mubr.bf16.gmra.mxu0 %v538
        %v1675 = vpop.f32.mrf.mxu0
        %v1676 = vadd.f32 %v1483, %v1675
        %v1677 = vpop.f32.mrf.mxu0
        %v1678 = vadd.f32 %v1485, %v1677
        %v1679 = vpop.f32.mrf.mxu0
        %v1680 = vadd.f32 %v1487, %v1679
        %v1681 = vpop.f32.mrf.mxu0
        %v1682 = vadd.f32 %v1489, %v1681
        %1683 = vmatprep.mubr.bf16.mxu0 %v547
        %1684 = vmatmul.mubr.bf16.gmra.mxu0 %v546
        %v1685 = vpop.f32.mrf.mxu0
        %v1686 = vadd.f32 %v1493, %v1685
        %v1687 = vpop.f32.mrf.mxu0
        %v1688 = vadd.f32 %v1495, %v1687
        %v1689 = vpop.f32.mrf.mxu0
        %v1690 = vadd.f32 %v1497, %v1689
        %v1691 = vpop.f32.mrf.mxu0
        %v1692 = vadd.f32 %v1499, %v1691
        %1693 = vmatprep.mubr.bf16.mxu0 %v555
        %1694 = vmatmul.mubr.bf16.gmra.mxu0 %v554
        %v1695 = vpop.f32.mrf.mxu0
        %v1696 = vadd.f32 %v1503, %v1695
        %v1697 = vpop.f32.mrf.mxu0
        %v1698 = vadd.f32 %v1505, %v1697
        %v1699 = vpop.f32.mrf.mxu0
        %v1700 = vadd.f32 %v1507, %v1699
        %v1701 = vpop.f32.mrf.mxu0
        %v1702 = vadd.f32 %v1509, %v1701
        %1703 = vmatprep.mubr.bf16.mxu0 %v563
        %1704 = vmatmul.mubr.bf16.gmra.mxu0 %v562
        %v1705 = vpop.f32.mrf.mxu0
        %v1706 = vadd.f32 %v1513, %v1705
        %v1707 = vpop.f32.mrf.mxu0
        %v1708 = vadd.f32 %v1515, %v1707
        %v1709 = vpop.f32.mrf.mxu0
        %v1710 = vadd.f32 %v1517, %v1709
        %v1711 = vpop.f32.mrf.mxu0
        %v1712 = vadd.f32 %v1519, %v1711
        %1713 = vmatprep.mubr.bf16.mxu0 %v571
        %1714 = vmatmul.mubr.bf16.gmra.mxu0 %v570
        %v1715 = vpop.f32.mrf.mxu0
        %v1716 = vadd.f32 %v1523, %v1715
        %v1717 = vpop.f32.mrf.mxu0
        %v1718 = vadd.f32 %v1525, %v1717
        %v1719 = vpop.f32.mrf.mxu0
        %v1720 = vadd.f32 %v1527, %v1719
        %v1721 = vpop.f32.mrf.mxu0
        %v1722 = vadd.f32 %v1529, %v1721
        %1723 = vmatprep.mubr.bf16.mxu0 %v579
        %1724 = vmatmul.mubr.bf16.gmra.mxu0 %v578
        %v1725 = vpop.f32.mrf.mxu0
        %v1726 = vadd.f32 %v1533, %v1725
        %v1727 = vpop.f32.mrf.mxu0
        %v1728 = vadd.f32 %v1535, %v1727
        %v1729 = vpop.f32.mrf.mxu0
        %v1730 = vadd.f32 %v1537, %v1729
        %v1731 = vpop.f32.mrf.mxu0
        %v1732 = vadd.f32 %v1539, %v1731
        %1733 = vmatprep.mubr.bf16.mxu0 %v587
        %1734 = vmatmul.mubr.bf16.gmra.mxu0 %v586
        %v1735 = vpop.f32.mrf.mxu0
        %v1736 = vadd.f32 %v1543, %v1735
        %v1737 = vpop.f32.mrf.mxu0
        %v1738 = vadd.f32 %v1545, %v1737
        %v1739 = vpop.f32.mrf.mxu0
        %v1740 = vadd.f32 %v1547, %v1739
        %v1741 = vpop.f32.mrf.mxu0
        %v1742 = vadd.f32 %v1549, %v1741
        %1743 = vmatprep.mubr.bf16.mxu0 %v595
        %1744 = vmatmul.mubr.bf16.gmra.mxu0 %v594
        %v1745 = vpop.f32.mrf.mxu0
        %v1746 = vadd.f32 %v1553, %v1745
        %v1747 = vpop.f32.mrf.mxu0
        %v1748 = vadd.f32 %v1555, %v1747
        %v1749 = vpop.f32.mrf.mxu0
        %v1750 = vadd.f32 %v1557, %v1749
        %v1751 = vpop.f32.mrf.mxu0
        %v1752 = vadd.f32 %v1559, %v1751
        %1753 = vmatprep.mubr.bf16.mxu0 %v603
        %1754 = vmatmul.mubr.bf16.gmra.mxu0 %v602
        %v1755 = vpop.f32.mrf.mxu0
        %v1756 = vadd.f32 %v1563, %v1755
        %v1757 = vpop.f32.mrf.mxu0
        %v1758 = vadd.f32 %v1565, %v1757
        %v1759 = vpop.f32.mrf.mxu0
        %v1760 = vadd.f32 %v1567, %v1759
        %v1761 = vpop.f32.mrf.mxu0
        %v1762 = vadd.f32 %v1569, %v1761
        %1763 = vmatprep.mubr.bf16.mxu0 %v611
        %1764 = vmatmul.mubr.bf16.gmra.mxu0 %v610
        %v1765 = vpop.f32.mrf.mxu0
        %v1766 = vadd.f32 %v1573, %v1765
        %v1767 = vpop.f32.mrf.mxu0
        %v1768 = vadd.f32 %v1575, %v1767
        %v1769 = vpop.f32.mrf.mxu0
        %v1770 = vadd.f32 %v1577, %v1769
        %v1771 = vpop.f32.mrf.mxu0
        %v1772 = vadd.f32 %v1579, %v1771
        %1773 = vmatprep.mubr.bf16.mxu0 %v619
        %1774 = vmatmul.mubr.bf16.gmra.mxu0 %v618
        %v1775 = vpop.f32.mrf.mxu0
        %v1776 = vadd.f32 %v1583, %v1775
        %v1777 = vpop.f32.mrf.mxu0
        %v1778 = vadd.f32 %v1585, %v1777
        %v1779 = vpop.f32.mrf.mxu0
        %v1780 = vadd.f32 %v1587, %v1779
        %v1781 = vpop.f32.mrf.mxu0
        %v1782 = vadd.f32 %v1589, %v1781
        %1783 = vmatprep.mubr.bf16.mxu0 %v627
        %1784 = vmatmul.mubr.bf16.gmra.mxu0 %v626
        %v1785 = vpop.f32.mrf.mxu0
        %v1786 = vadd.f32 %v1593, %v1785
        %v1787 = vpop.f32.mrf.mxu0
        %v1788 = vadd.f32 %v1595, %v1787
        %v1789 = vpop.f32.mrf.mxu0
        %v1790 = vadd.f32 %v1597, %v1789
        %v1791 = vpop.f32.mrf.mxu0
        %v1792 = vadd.f32 %v1599, %v1791
        %1793 = vmatprep.mubr.bf16.mxu0 %v635
        %1794 = vmatmul.mubr.bf16.gmra.mxu0 %v634
        %v1795 = vpop.f32.mrf.mxu0
        %v1796 = vadd.f32 %v1603, %v1795
        %v1797 = vpop.f32.mrf.mxu0
        %v1798 = vadd.f32 %v1605, %v1797
        %v1799 = vpop.f32.mrf.mxu0
        %v1800 = vadd.f32 %v1607, %v1799
        %v1801 = vpop.f32.mrf.mxu0
        %v1802 = vadd.f32 %v1609, %v1801
        %1803 = vmatprep.mubr.bf16.mxu0 %v643
        %1804 = vmatmul.mubr.bf16.gmra.mxu0 %v642
        %v1805 = vpop.f32.mrf.mxu0
        %v1806 = vadd.f32 %v1613, %v1805
        %v1807 = vpop.f32.mrf.mxu0
        %v1808 = vadd.f32 %v1615, %v1807
        %v1809 = vpop.f32.mrf.mxu0
        %v1810 = vadd.f32 %v1617, %v1809
        %v1811 = vpop.f32.mrf.mxu0
        %v1812 = vadd.f32 %v1619, %v1811
        %1813 = vdwg.mxu0
        %1814 = vmatprep.subr.bf16.mxu0 %v1251
        %1815 = vmatpush1.bf16.msra.mxu0 %v1250
        %1816 = vmatprep.subr.bf16.mxu0 %v1249
        %1817 = vmatpush1.bf16.msra.mxu0 %v1248
        %1818 = vmatprep.subr.bf16.mxu0 %v1247
        %1819 = vmatpush1.bf16.msra.mxu0 %v1246
        %1820 = vmatprep.subr.bf16.mxu0 %v1245
        %1821 = vmatpush1.bf16.msra.mxu0 %v1244
        %1822 = vmatprep.subr.bf16.mxu0 %v1243
        %1823 = vmatpush1.bf16.msra.mxu0 %v1242
        %1824 = vmatprep.subr.bf16.mxu0 %v1241
        %1825 = vmatpush1.bf16.msra.mxu0 %v1240
        %1826 = vmatprep.subr.bf16.mxu0 %v1239
        %1827 = vmatpush1.bf16.msra.mxu0 %v1238
        %1828 = vmatprep.subr.bf16.mxu0 %v1237
        %1829 = vmatpush1.bf16.msra.mxu0 %v1236
        %1830 = vmatprep.subr.bf16.mxu0 %v1267
        %1831 = vmatpush2.bf16.msra.mxu0 %v1266
        %1832 = vmatprep.subr.bf16.mxu0 %v1265
        %1833 = vmatpush2.bf16.msra.mxu0 %v1264
        %1834 = vmatprep.subr.bf16.mxu0 %v1263
        %1835 = vmatpush2.bf16.msra.mxu0 %v1262
        %1836 = vmatprep.subr.bf16.mxu0 %v1261
        %1837 = vmatpush2.bf16.msra.mxu0 %v1260
        %1838 = vmatprep.subr.bf16.mxu0 %v1259
        %1839 = vmatpush2.bf16.msra.mxu0 %v1258
        %1840 = vmatprep.subr.bf16.mxu0 %v1257
        %1841 = vmatpush2.bf16.msra.mxu0 %v1256
        %1842 = vmatprep.subr.bf16.mxu0 %v1255
        %1843 = vmatpush2.bf16.msra.mxu0 %v1254
        %1844 = vmatprep.subr.bf16.mxu0 %v1253
        %1845 = vmatpush2.bf16.msra.mxu0 %v1252
        %1846 = vmatprep.mubr.bf16.mxu0 %v525
        %1847 = vmatmul.mubr.bf16.gmra.mxu0 %v524
        %v1848 = vpop.f32.mrf.mxu0
        %v1849 = vadd.f32 %v1656, %v1848
        %v1850 = vpop.f32.mrf.mxu0
        %v1851 = vadd.f32 %v1658, %v1850
        %v1852 = vpop.f32.mrf.mxu0
        %v1853 = vadd.f32 %v1660, %v1852
        %v1854 = vpop.f32.mrf.mxu0
        %v1855 = vadd.f32 %v1662, %v1854
        %1856 = vmatprep.mubr.bf16.mxu0 %v533
        %1857 = vmatmul.mubr.bf16.gmra.mxu0 %v532
        %v1858 = vpop.f32.mrf.mxu0
        %v1859 = vadd.f32 %v1666, %v1858
        %v1860 = vpop.f32.mrf.mxu0
        %v1861 = vadd.f32 %v1668, %v1860
        %v1862 = vpop.f32.mrf.mxu0
        %v1863 = vadd.f32 %v1670, %v1862
        %v1864 = vpop.f32.mrf.mxu0
        %v1865 = vadd.f32 %v1672, %v1864
        %1866 = vmatprep.mubr.bf16.mxu0 %v541
        %1867 = vmatmul.mubr.bf16.gmra.mxu0 %v540
        %v1868 = vpop.f32.mrf.mxu0
        %v1869 = vadd.f32 %v1676, %v1868
        %v1870 = vpop.f32.mrf.mxu0
        %v1871 = vadd.f32 %v1678, %v1870
        %v1872 = vpop.f32.mrf.mxu0
        %v1873 = vadd.f32 %v1680, %v1872
        %v1874 = vpop.f32.mrf.mxu0
        %v1875 = vadd.f32 %v1682, %v1874
        %1876 = vmatprep.mubr.bf16.mxu0 %v549
        %1877 = vmatmul.mubr.bf16.gmra.mxu0 %v548
        %v1878 = vpop.f32.mrf.mxu0
        %v1879 = vadd.f32 %v1686, %v1878
        %v1880 = vpop.f32.mrf.mxu0
        %v1881 = vadd.f32 %v1688, %v1880
        %v1882 = vpop.f32.mrf.mxu0
        %v1883 = vadd.f32 %v1690, %v1882
        %v1884 = vpop.f32.mrf.mxu0
        %v1885 = vadd.f32 %v1692, %v1884
        %1886 = vmatprep.mubr.bf16.mxu0 %v557
        %1887 = vmatmul.mubr.bf16.gmra.mxu0 %v556
        %v1888 = vpop.f32.mrf.mxu0
        %v1889 = vadd.f32 %v1696, %v1888
        %v1890 = vpop.f32.mrf.mxu0
        %v1891 = vadd.f32 %v1698, %v1890
        %v1892 = vpop.f32.mrf.mxu0
        %v1893 = vadd.f32 %v1700, %v1892
        %v1894 = vpop.f32.mrf.mxu0
        %v1895 = vadd.f32 %v1702, %v1894
        %1896 = vmatprep.mubr.bf16.mxu0 %v565
        %1897 = vmatmul.mubr.bf16.gmra.mxu0 %v564
        %v1898 = vpop.f32.mrf.mxu0
        %v1899 = vadd.f32 %v1706, %v1898
        %v1900 = vpop.f32.mrf.mxu0
        %v1901 = vadd.f32 %v1708, %v1900
        %v1902 = vpop.f32.mrf.mxu0
        %v1903 = vadd.f32 %v1710, %v1902
        %v1904 = vpop.f32.mrf.mxu0
        %v1905 = vadd.f32 %v1712, %v1904
        %1906 = vmatprep.mubr.bf16.mxu0 %v573
        %1907 = vmatmul.mubr.bf16.gmra.mxu0 %v572
        %v1908 = vpop.f32.mrf.mxu0
        %v1909 = vadd.f32 %v1716, %v1908
        %v1910 = vpop.f32.mrf.mxu0
        %v1911 = vadd.f32 %v1718, %v1910
        %v1912 = vpop.f32.mrf.mxu0
        %v1913 = vadd.f32 %v1720, %v1912
        %v1914 = vpop.f32.mrf.mxu0
        %v1915 = vadd.f32 %v1722, %v1914
        %1916 = vmatprep.mubr.bf16.mxu0 %v581
        %1917 = vmatmul.mubr.bf16.gmra.mxu0 %v580
        %v1918 = vpop.f32.mrf.mxu0
        %v1919 = vadd.f32 %v1726, %v1918
        %v1920 = vpop.f32.mrf.mxu0
        %v1921 = vadd.f32 %v1728, %v1920
        %v1922 = vpop.f32.mrf.mxu0
        %v1923 = vadd.f32 %v1730, %v1922
        %v1924 = vpop.f32.mrf.mxu0
        %v1925 = vadd.f32 %v1732, %v1924
        %1926 = vmatprep.mubr.bf16.mxu0 %v589
        %1927 = vmatmul.mubr.bf16.gmra.mxu0 %v588
        %v1928 = vpop.f32.mrf.mxu0
        %v1929 = vadd.f32 %v1736, %v1928
        %v1930 = vpop.f32.mrf.mxu0
        %v1931 = vadd.f32 %v1738, %v1930
        %v1932 = vpop.f32.mrf.mxu0
        %v1933 = vadd.f32 %v1740, %v1932
        %v1934 = vpop.f32.mrf.mxu0
        %v1935 = vadd.f32 %v1742, %v1934
        %1936 = vmatprep.mubr.bf16.mxu0 %v597
        %1937 = vmatmul.mubr.bf16.gmra.mxu0 %v596
        %v1938 = vpop.f32.mrf.mxu0
        %v1939 = vadd.f32 %v1746, %v1938
        %v1940 = vpop.f32.mrf.mxu0
        %v1941 = vadd.f32 %v1748, %v1940
        %v1942 = vpop.f32.mrf.mxu0
        %v1943 = vadd.f32 %v1750, %v1942
        %v1944 = vpop.f32.mrf.mxu0
        %v1945 = vadd.f32 %v1752, %v1944
        %1946 = vmatprep.mubr.bf16.mxu0 %v605
        %1947 = vmatmul.mubr.bf16.gmra.mxu0 %v604
        %v1948 = vpop.f32.mrf.mxu0
        %v1949 = vadd.f32 %v1756, %v1948
        %v1950 = vpop.f32.mrf.mxu0
        %v1951 = vadd.f32 %v1758, %v1950
        %v1952 = vpop.f32.mrf.mxu0
        %v1953 = vadd.f32 %v1760, %v1952
        %v1954 = vpop.f32.mrf.mxu0
        %v1955 = vadd.f32 %v1762, %v1954
        %1956 = vmatprep.mubr.bf16.mxu0 %v613
        %1957 = vmatmul.mubr.bf16.gmra.mxu0 %v612
        %v1958 = vpop.f32.mrf.mxu0
        %v1959 = vadd.f32 %v1766, %v1958
        %v1960 = vpop.f32.mrf.mxu0
        %v1961 = vadd.f32 %v1768, %v1960
        %v1962 = vpop.f32.mrf.mxu0
        %v1963 = vadd.f32 %v1770, %v1962
        %v1964 = vpop.f32.mrf.mxu0
        %v1965 = vadd.f32 %v1772, %v1964
        %1966 = vmatprep.mubr.bf16.mxu0 %v621
        %1967 = vmatmul.mubr.bf16.gmra.mxu0 %v620
        %v1968 = vpop.f32.mrf.mxu0
        %v1969 = vadd.f32 %v1776, %v1968
        %v1970 = vpop.f32.mrf.mxu0
        %v1971 = vadd.f32 %v1778, %v1970
        %v1972 = vpop.f32.mrf.mxu0
        %v1973 = vadd.f32 %v1780, %v1972
        %v1974 = vpop.f32.mrf.mxu0
        %v1975 = vadd.f32 %v1782, %v1974
        %1976 = vmatprep.mubr.bf16.mxu0 %v629
        %1977 = vmatmul.mubr.bf16.gmra.mxu0 %v628
        %v1978 = vpop.f32.mrf.mxu0
        %v1979 = vadd.f32 %v1786, %v1978
        %v1980 = vpop.f32.mrf.mxu0
        %v1981 = vadd.f32 %v1788, %v1980
        %v1982 = vpop.f32.mrf.mxu0
        %v1983 = vadd.f32 %v1790, %v1982
        %v1984 = vpop.f32.mrf.mxu0
        %v1985 = vadd.f32 %v1792, %v1984
        %1986 = vmatprep.mubr.bf16.mxu0 %v637
        %1987 = vmatmul.mubr.bf16.gmra.mxu0 %v636
        %v1988 = vpop.f32.mrf.mxu0
        %v1989 = vadd.f32 %v1796, %v1988
        %v1990 = vpop.f32.mrf.mxu0
        %v1991 = vadd.f32 %v1798, %v1990
        %v1992 = vpop.f32.mrf.mxu0
        %v1993 = vadd.f32 %v1800, %v1992
        %v1994 = vpop.f32.mrf.mxu0
        %v1995 = vadd.f32 %v1802, %v1994
        %1996 = vmatprep.mubr.bf16.mxu0 %v645
        %1997 = vmatmul.mubr.bf16.gmra.mxu0 %v644
        %v1998 = vpop.f32.mrf.mxu0
        %v1999 = vadd.f32 %v1806, %v1998
        %v2000 = vpop.f32.mrf.mxu0
        %v2001 = vadd.f32 %v1808, %v2000
        %v2002 = vpop.f32.mrf.mxu0
        %v2003 = vadd.f32 %v1810, %v2002
        %v2004 = vpop.f32.mrf.mxu0
        %v2005 = vadd.f32 %v1812, %v2004
        %2006 = vdwg.mxu0
        %2007 = vmatprep.subr.bf16.mxu0 %v1283
        %2008 = vmatpush1.bf16.msra.mxu0 %v1282
        %2009 = vmatprep.subr.bf16.mxu0 %v1281
        %2010 = vmatpush1.bf16.msra.mxu0 %v1280
        %2011 = vmatprep.subr.bf16.mxu0 %v1279
        %2012 = vmatpush1.bf16.msra.mxu0 %v1278
        %2013 = vmatprep.subr.bf16.mxu0 %v1277
        %2014 = vmatpush1.bf16.msra.mxu0 %v1276
        %2015 = vmatprep.subr.bf16.mxu0 %v1275
        %2016 = vmatpush1.bf16.msra.mxu0 %v1274
        %2017 = vmatprep.subr.bf16.mxu0 %v1273
        %2018 = vmatpush1.bf16.msra.mxu0 %v1272
        %2019 = vmatprep.subr.bf16.mxu0 %v1271
        %2020 = vmatpush1.bf16.msra.mxu0 %v1270
        %2021 = vmatprep.subr.bf16.mxu0 %v1269
        %2022 = vmatpush1.bf16.msra.mxu0 %v1268
        %2023 = vmatprep.subr.bf16.mxu0 %v1299
        %2024 = vmatpush2.bf16.msra.mxu0 %v1298
        %2025 = vmatprep.subr.bf16.mxu0 %v1297
        %2026 = vmatpush2.bf16.msra.mxu0 %v1296
        %2027 = vmatprep.subr.bf16.mxu0 %v1295
        %2028 = vmatpush2.bf16.msra.mxu0 %v1294
        %2029 = vmatprep.subr.bf16.mxu0 %v1293
        %2030 = vmatpush2.bf16.msra.mxu0 %v1292
        %2031 = vmatprep.subr.bf16.mxu0 %v1291
        %2032 = vmatpush2.bf16.msra.mxu0 %v1290
        %2033 = vmatprep.subr.bf16.mxu0 %v1289
        %2034 = vmatpush2.bf16.msra.mxu0 %v1288
        %2035 = vmatprep.subr.bf16.mxu0 %v1287
        %2036 = vmatpush2.bf16.msra.mxu0 %v1286
        %2037 = vmatprep.subr.bf16.mxu0 %v1285
        %2038 = vmatpush2.bf16.msra.mxu0 %v1284
        %2039 = vmatprep.mubr.bf16.mxu0 %v527
        %2040 = vmatmul.mubr.bf16.gmra.mxu0 %v526
        %v2041 = vpop.f32.mrf.mxu0
        %v2042 = vadd.f32 %v1849, %v2041
        %v2043 = vpop.f32.mrf.mxu0
        %v2044 = vadd.f32 %v1851, %v2043
        %v2045 = vpop.f32.mrf.mxu0
        %v2046 = vadd.f32 %v1853, %v2045
        %v2047 = vpop.f32.mrf.mxu0
        %v2048 = vadd.f32 %v1855, %v2047
        %2049 = vmatprep.mubr.bf16.mxu0 %v535
        %2050 = vmatmul.mubr.bf16.gmra.mxu0 %v534
        %v2051 = vpop.f32.mrf.mxu0
        %v2052 = vadd.f32 %v1859, %v2051
        %v2053 = vpop.f32.mrf.mxu0
        %v2054 = vadd.f32 %v1861, %v2053
        %v2055 = vpop.f32.mrf.mxu0
        %v2056 = vadd.f32 %v1863, %v2055
        %v2057 = vpop.f32.mrf.mxu0
        %v2058 = vadd.f32 %v1865, %v2057
        %2059 = vmatprep.mubr.bf16.mxu0 %v543
        %2060 = vmatmul.mubr.bf16.gmra.mxu0 %v542
        %v2061 = vpop.f32.mrf.mxu0
        %v2062 = vadd.f32 %v1869, %v2061
        %v2063 = vpop.f32.mrf.mxu0
        %v2064 = vadd.f32 %v1871, %v2063
        %v2065 = vpop.f32.mrf.mxu0
        %v2066 = vadd.f32 %v1873, %v2065
        %v2067 = vpop.f32.mrf.mxu0
        %v2068 = vadd.f32 %v1875, %v2067
        %2069 = vmatprep.mubr.bf16.mxu0 %v551
        %2070 = vmatmul.mubr.bf16.gmra.mxu0 %v550
        %v2071 = vpop.f32.mrf.mxu0
        %v2072 = vadd.f32 %v1879, %v2071
        %v2073 = vpop.f32.mrf.mxu0
        %v2074 = vadd.f32 %v1881, %v2073
        %v2075 = vpop.f32.mrf.mxu0
        %v2076 = vadd.f32 %v1883, %v2075
        %v2077 = vpop.f32.mrf.mxu0
        %v2078 = vadd.f32 %v1885, %v2077
        %2079 = vmatprep.mubr.bf16.mxu0 %v559
        %2080 = vmatmul.mubr.bf16.gmra.mxu0 %v558
        %v2081 = vpop.f32.mrf.mxu0
        %v2082 = vadd.f32 %v1889, %v2081
        %v2083 = vpop.f32.mrf.mxu0
        %v2084 = vadd.f32 %v1891, %v2083
        %v2085 = vpop.f32.mrf.mxu0
        %v2086 = vadd.f32 %v1893, %v2085
        %v2087 = vpop.f32.mrf.mxu0
        %v2088 = vadd.f32 %v1895, %v2087
        %2089 = vmatprep.mubr.bf16.mxu0 %v567
        %2090 = vmatmul.mubr.bf16.gmra.mxu0 %v566
        %v2091 = vpop.f32.mrf.mxu0
        %v2092 = vadd.f32 %v1899, %v2091
        %v2093 = vpop.f32.mrf.mxu0
        %v2094 = vadd.f32 %v1901, %v2093
        %v2095 = vpop.f32.mrf.mxu0
        %v2096 = vadd.f32 %v1903, %v2095
        %v2097 = vpop.f32.mrf.mxu0
        %v2098 = vadd.f32 %v1905, %v2097
        %2099 = vmatprep.mubr.bf16.mxu0 %v575
        %2100 = vmatmul.mubr.bf16.gmra.mxu0 %v574
        %v2101 = vpop.f32.mrf.mxu0
        %v2102 = vadd.f32 %v1909, %v2101
        %v2103 = vpop.f32.mrf.mxu0
        %v2104 = vadd.f32 %v1911, %v2103
        %v2105 = vpop.f32.mrf.mxu0
        %v2106 = vadd.f32 %v1913, %v2105
        %v2107 = vpop.f32.mrf.mxu0
        %v2108 = vadd.f32 %v1915, %v2107
        %2109 = vmatprep.mubr.bf16.mxu0 %v583
        %2110 = vmatmul.mubr.bf16.gmra.mxu0 %v582
        %v2111 = vpop.f32.mrf.mxu0
        %v2112 = vadd.f32 %v1919, %v2111
        %v2113 = vpop.f32.mrf.mxu0
        %v2114 = vadd.f32 %v1921, %v2113
        %v2115 = vpop.f32.mrf.mxu0
        %v2116 = vadd.f32 %v1923, %v2115
        %v2117 = vpop.f32.mrf.mxu0
        %v2118 = vadd.f32 %v1925, %v2117
        %2119 = vmatprep.mubr.bf16.mxu0 %v591
        %2120 = vmatmul.mubr.bf16.gmra.mxu0 %v590
        %v2121 = vpop.f32.mrf.mxu0
        %v2122 = vadd.f32 %v1929, %v2121
        %v2123 = vpop.f32.mrf.mxu0
        %v2124 = vadd.f32 %v1931, %v2123
        %v2125 = vpop.f32.mrf.mxu0
        %v2126 = vadd.f32 %v1933, %v2125
        %v2127 = vpop.f32.mrf.mxu0
        %v2128 = vadd.f32 %v1935, %v2127
        %2129 = vmatprep.mubr.bf16.mxu0 %v599
        %2130 = vmatmul.mubr.bf16.gmra.mxu0 %v598
        %v2131 = vpop.f32.mrf.mxu0
        %v2132 = vadd.f32 %v1939, %v2131
        %v2133 = vpop.f32.mrf.mxu0
        %v2134 = vadd.f32 %v1941, %v2133
        %v2135 = vpop.f32.mrf.mxu0
        %v2136 = vadd.f32 %v1943, %v2135
        %v2137 = vpop.f32.mrf.mxu0
        %v2138 = vadd.f32 %v1945, %v2137
        %2139 = vmatprep.mubr.bf16.mxu0 %v607
        %2140 = vmatmul.mubr.bf16.gmra.mxu0 %v606
        %v2141 = vpop.f32.mrf.mxu0
        %v2142 = vadd.f32 %v1949, %v2141
        %v2143 = vpop.f32.mrf.mxu0
        %v2144 = vadd.f32 %v1951, %v2143
        %v2145 = vpop.f32.mrf.mxu0
        %v2146 = vadd.f32 %v1953, %v2145
        %v2147 = vpop.f32.mrf.mxu0
        %v2148 = vadd.f32 %v1955, %v2147
        %2149 = vmatprep.mubr.bf16.mxu0 %v615
        %2150 = vmatmul.mubr.bf16.gmra.mxu0 %v614
        %v2151 = vpop.f32.mrf.mxu0
        %v2152 = vadd.f32 %v1959, %v2151
        %v2153 = vpop.f32.mrf.mxu0
        %v2154 = vadd.f32 %v1961, %v2153
        %v2155 = vpop.f32.mrf.mxu0
        %v2156 = vadd.f32 %v1963, %v2155
        %v2157 = vpop.f32.mrf.mxu0
        %v2158 = vadd.f32 %v1965, %v2157
        %2159 = vmatprep.mubr.bf16.mxu0 %v623
        %2160 = vmatmul.mubr.bf16.gmra.mxu0 %v622
        %v2161 = vpop.f32.mrf.mxu0
        %v2162 = vadd.f32 %v1969, %v2161
        %v2163 = vpop.f32.mrf.mxu0
        %v2164 = vadd.f32 %v1971, %v2163
        %v2165 = vpop.f32.mrf.mxu0
        %v2166 = vadd.f32 %v1973, %v2165
        %v2167 = vpop.f32.mrf.mxu0
        %v2168 = vadd.f32 %v1975, %v2167
        %2169 = vmatprep.mubr.bf16.mxu0 %v631
        %2170 = vmatmul.mubr.bf16.gmra.mxu0 %v630
        %v2171 = vpop.f32.mrf.mxu0
        %v2172 = vadd.f32 %v1979, %v2171
        %v2173 = vpop.f32.mrf.mxu0
        %v2174 = vadd.f32 %v1981, %v2173
        %v2175 = vpop.f32.mrf.mxu0
        %v2176 = vadd.f32 %v1983, %v2175
        %v2177 = vpop.f32.mrf.mxu0
        %v2178 = vadd.f32 %v1985, %v2177
        %2179 = vmatprep.mubr.bf16.mxu0 %v639
        %2180 = vmatmul.mubr.bf16.gmra.mxu0 %v638
        %v2181 = vpop.f32.mrf.mxu0
        %v2182 = vadd.f32 %v1989, %v2181
        %v2183 = vpop.f32.mrf.mxu0
        %v2184 = vadd.f32 %v1991, %v2183
        %v2185 = vpop.f32.mrf.mxu0
        %v2186 = vadd.f32 %v1993, %v2185
        %v2187 = vpop.f32.mrf.mxu0
        %v2188 = vadd.f32 %v1995, %v2187
        %2189 = vmatprep.mubr.bf16.mxu0 %v647
        %2190 = vmatmul.mubr.bf16.gmra.mxu0 %v646
        %v2191 = vpop.f32.mrf.mxu0
        %v2192 = vadd.f32 %v1999, %v2191
        %v2193 = vpop.f32.mrf.mxu0
        %v2194 = vadd.f32 %v2001, %v2193
        %v2195 = vpop.f32.mrf.mxu0
        %v2196 = vadd.f32 %v2003, %v2195
        %v2197 = vpop.f32.mrf.mxu0
        %v2198 = vadd.f32 %v2005, %v2197
        %2199 = vdwg.mxu0
        %v2200 = vsub.f32 0.0, %v2042
        %v2201 = vsub.f32 0.0, %v2044
        %v2202 = vsub.f32 0.0, %v2046
        %v2203 = vsub.f32 0.0, %v2048
        %v2204 = vsub.f32 0.0, %v2052
        %v2205 = vsub.f32 0.0, %v2054
        %v2206 = vsub.f32 0.0, %v2056
        %v2207 = vsub.f32 0.0, %v2058
        %v2208 = vsub.f32 0.0, %v2062
        %v2209 = vsub.f32 0.0, %v2064
        %v2210 = vsub.f32 0.0, %v2066
        %v2211 = vsub.f32 0.0, %v2068
        %v2212 = vsub.f32 0.0, %v2072
        %v2213 = vsub.f32 0.0, %v2074
        %v2214 = vsub.f32 0.0, %v2076
        %v2215 = vsub.f32 0.0, %v2078
        %v2216 = vsub.f32 0.0, %v2082
        %v2217 = vsub.f32 0.0, %v2084
        %v2218 = vsub.f32 0.0, %v2086
        %v2219 = vsub.f32 0.0, %v2088
        %v2220 = vsub.f32 0.0, %v2092
        %v2221 = vsub.f32 0.0, %v2094
        %v2222 = vsub.f32 0.0, %v2096
        %v2223 = vsub.f32 0.0, %v2098
        %v2224 = vsub.f32 0.0, %v2102
        %v2225 = vsub.f32 0.0, %v2104
        %v2226 = vsub.f32 0.0, %v2106
        %v2227 = vsub.f32 0.0, %v2108
        %v2228 = vsub.f32 0.0, %v2112
        %v2229 = vsub.f32 0.0, %v2114
        %v2230 = vsub.f32 0.0, %v2116
        %v2231 = vsub.f32 0.0, %v2118
        %v2232 = vsub.f32 0.0, %v2122
        %v2233 = vsub.f32 0.0, %v2124
        %v2234 = vsub.f32 0.0, %v2126
        %v2235 = vsub.f32 0.0, %v2128
        %v2236 = vsub.f32 0.0, %v2132
        %v2237 = vsub.f32 0.0, %v2134
        %v2238 = vsub.f32 0.0, %v2136
        %v2239 = vsub.f32 0.0, %v2138
        %v2240 = vsub.f32 0.0, %v2142
        %v2241 = vsub.f32 0.0, %v2144
        %v2242 = vsub.f32 0.0, %v2146
        %v2243 = vsub.f32 0.0, %v2148
        %v2244 = vsub.f32 0.0, %v2152
        %v2245 = vsub.f32 0.0, %v2154
        %v2246 = vsub.f32 0.0, %v2156
        %v2247 = vsub.f32 0.0, %v2158
        %v2248 = vsub.f32 0.0, %v2162
        %v2249 = vsub.f32 0.0, %v2164
        %v2250 = vsub.f32 0.0, %v2166
        %v2251 = vsub.f32 0.0, %v2168
        %v2252 = vsub.f32 0.0, %v2172
        %v2253 = vsub.f32 0.0, %v2174
        %v2254 = vsub.f32 0.0, %v2176
        %v2255 = vsub.f32 0.0, %v2178
        %v2256 = vsub.f32 0.0, %v2182
        %v2257 = vsub.f32 0.0, %v2184
        %v2258 = vsub.f32 0.0, %v2186
        %v2259 = vsub.f32 0.0, %v2188
        %v2260 = vsub.f32 0.0, %v2192
        %v2261 = vsub.f32 0.0, %v2194
        %v2262 = vsub.f32 0.0, %v2196
        %v2263 = vsub.f32 0.0, %v2198
        %v2264 = vmul.f32 %v2200, 1.442695
        %v2265 = vpow.pop %v2264
        %v2266 = vmul.f32 %v2201, 1.442695
        %v2267 = vpow.pop %v2266
        %v2268 = vmul.f32 %v2202, 1.442695
        %v2269 = vpow.pop %v2268
        %v2270 = vmul.f32 %v2203, 1.442695
        %v2271 = vpow.pop %v2270
        %v2272 = vmul.f32 %v2204, 1.442695
        %v2273 = vpow.pop %v2272
        %v2274 = vmul.f32 %v2205, 1.442695
        %v2275 = vpow.pop %v2274
        %v2276 = vmul.f32 %v2206, 1.442695
        %v2277 = vpow.pop %v2276
        %v2278 = vmul.f32 %v2207, 1.442695
        %v2279 = vpow.pop %v2278
        %v2280 = vmul.f32 %v2208, 1.442695
        %v2281 = vpow.pop %v2280
        %v2282 = vmul.f32 %v2209, 1.442695
        %v2283 = vpow.pop %v2282
        %v2284 = vmul.f32 %v2210, 1.442695
        %v2285 = vpow.pop %v2284
        %v2286 = vmul.f32 %v2211, 1.442695
        %v2287 = vpow.pop %v2286
        %v2288 = vmul.f32 %v2212, 1.442695
        %v2289 = vpow.pop %v2288
        %v2290 = vmul.f32 %v2213, 1.442695
        %v2291 = vpow.pop %v2290
        %v2292 = vmul.f32 %v2214, 1.442695
        %v2293 = vpow.pop %v2292
        %v2294 = vmul.f32 %v2215, 1.442695
        %v2295 = vpow.pop %v2294
        %v2296 = vmul.f32 %v2216, 1.442695
        %v2297 = vpow.pop %v2296
        %v2298 = vmul.f32 %v2217, 1.442695
        %v2299 = vpow.pop %v2298
        %v2300 = vmul.f32 %v2218, 1.442695
        %v2301 = vpow.pop %v2300
        %v2302 = vmul.f32 %v2219, 1.442695
        %v2303 = vpow.pop %v2302
        %v2304 = vmul.f32 %v2220, 1.442695
        %v2305 = vpow.pop %v2304
        %v2306 = vmul.f32 %v2221, 1.442695
        %v2307 = vpow.pop %v2306
        %v2308 = vmul.f32 %v2222, 1.442695
        %v2309 = vpow.pop %v2308
        %v2310 = vmul.f32 %v2223, 1.442695
        %v2311 = vpow.pop %v2310
        %v2312 = vmul.f32 %v2224, 1.442695
        %v2313 = vpow.pop %v2312
        %v2314 = vmul.f32 %v2225, 1.442695
        %v2315 = vpow.pop %v2314
        %v2316 = vmul.f32 %v2226, 1.442695
        %v2317 = vpow.pop %v2316
        %v2318 = vmul.f32 %v2227, 1.442695
        %v2319 = vpow.pop %v2318
        %v2320 = vmul.f32 %v2228, 1.442695
        %v2321 = vpow.pop %v2320
        %v2322 = vmul.f32 %v2229, 1.442695
        %v2323 = vpow.pop %v2322
        %v2324 = vmul.f32 %v2230, 1.442695
        %v2325 = vpow.pop %v2324
        %v2326 = vmul.f32 %v2231, 1.442695
        %v2327 = vpow.pop %v2326
        %v2328 = vmul.f32 %v2232, 1.442695
        %v2329 = vpow.pop %v2328
        %v2330 = vmul.f32 %v2233, 1.442695
        %v2331 = vpow.pop %v2330
        %v2332 = vmul.f32 %v2234, 1.442695
        %v2333 = vpow.pop %v2332
        %v2334 = vmul.f32 %v2235, 1.442695
        %v2335 = vpow.pop %v2334
        %v2336 = vmul.f32 %v2236, 1.442695
        %v2337 = vpow.pop %v2336
        %v2338 = vmul.f32 %v2237, 1.442695
        %v2339 = vpow.pop %v2338
        %v2340 = vmul.f32 %v2238, 1.442695
        %v2341 = vpow.pop %v2340
        %v2342 = vmul.f32 %v2239, 1.442695
        %v2343 = vpow.pop %v2342
        %v2344 = vmul.f32 %v2240, 1.442695
        %v2345 = vpow.pop %v2344
        %v2346 = vmul.f32 %v2241, 1.442695
        %v2347 = vpow.pop %v2346
        %v2348 = vmul.f32 %v2242, 1.442695
        %v2349 = vpow.pop %v2348
        %v2350 = vmul.f32 %v2243, 1.442695
        %v2351 = vpow.pop %v2350
        %v2352 = vmul.f32 %v2244, 1.442695
        %v2353 = vpow.pop %v2352
        %v2354 = vmul.f32 %v2245, 1.442695
        %v2355 = vpow.pop %v2354
        %v2356 = vmul.f32 %v2246, 1.442695
        %v2357 = vpow.pop %v2356
        %v2358 = vmul.f32 %v2247, 1.442695
        %v2359 = vpow.pop %v2358
        %v2360 = vmul.f32 %v2248, 1.442695
        %v2361 = vpow.pop %v2360
        %v2362 = vmul.f32 %v2249, 1.442695
        %v2363 = vpow.pop %v2362
        %v2364 = vmul.f32 %v2250, 1.442695
        %v2365 = vpow.pop %v2364
        %v2366 = vmul.f32 %v2251, 1.442695
        %v2367 = vpow.pop %v2366
        %v2368 = vmul.f32 %v2252, 1.442695
        %v2369 = vpow.pop %v2368
        %v2370 = vmul.f32 %v2253, 1.442695
        %v2371 = vpow.pop %v2370
        %v2372 = vmul.f32 %v2254, 1.442695
        %v2373 = vpow.pop %v2372
        %v2374 = vmul.f32 %v2255, 1.442695
        %v2375 = vpow.pop %v2374
        %v2376 = vmul.f32 %v2256, 1.442695
        %v2377 = vpow.pop %v2376
        %v2378 = vmul.f32 %v2257, 1.442695
        %v2379 = vpow.pop %v2378
        %v2380 = vmul.f32 %v2258, 1.442695
        %v2381 = vpow.pop %v2380
        %v2382 = vmul.f32 %v2259, 1.442695
        %v2383 = vpow.pop %v2382
        %v2384 = vmul.f32 %v2260, 1.442695
        %v2385 = vpow.pop %v2384
        %v2386 = vmul.f32 %v2261, 1.442695
        %v2387 = vpow.pop %v2386
        %v2388 = vmul.f32 %v2262, 1.442695
        %v2389 = vpow.pop %v2388
        %v2390 = vmul.f32 %v2263, 1.442695
        %v2391 = vpow.pop %v2390
        %v2392 = vadd.f32 %v2265, 1.0
        %v2393 = vadd.f32 %v2267, 1.0
        %v2394 = vadd.f32 %v2269, 1.0
        %v2395 = vadd.f32 %v2271, 1.0
        %v2396 = vadd.f32 %v2273, 1.0
        %v2397 = vadd.f32 %v2275, 1.0
        %v2398 = vadd.f32 %v2277, 1.0
        %v2399 = vadd.f32 %v2279, 1.0
        %v2400 = vadd.f32 %v2281, 1.0
        %v2401 = vadd.f32 %v2283, 1.0
        %v2402 = vadd.f32 %v2285, 1.0
        %v2403 = vadd.f32 %v2287, 1.0
        %v2404 = vadd.f32 %v2289, 1.0
        %v2405 = vadd.f32 %v2291, 1.0
        %v2406 = vadd.f32 %v2293, 1.0
        %v2407 = vadd.f32 %v2295, 1.0
        %v2408 = vadd.f32 %v2297, 1.0
        %v2409 = vadd.f32 %v2299, 1.0
        %v2410 = vadd.f32 %v2301, 1.0
        %v2411 = vadd.f32 %v2303, 1.0
        %v2412 = vadd.f32 %v2305, 1.0
        %v2413 = vadd.f32 %v2307, 1.0
        %v2414 = vadd.f32 %v2309, 1.0
        %v2415 = vadd.f32 %v2311, 1.0
        %v2416 = vadd.f32 %v2313, 1.0
        %v2417 = vadd.f32 %v2315, 1.0
        %v2418 = vadd.f32 %v2317, 1.0
        %v2419 = vadd.f32 %v2319, 1.0
        %v2420 = vadd.f32 %v2321, 1.0
        %v2421 = vadd.f32 %v2323, 1.0
        %v2422 = vadd.f32 %v2325, 1.0
        %v2423 = vadd.f32 %v2327, 1.0
        %v2424 = vadd.f32 %v2329, 1.0
        %v2425 = vadd.f32 %v2331, 1.0
        %v2426 = vadd.f32 %v2333, 1.0
        %v2427 = vadd.f32 %v2335, 1.0
        %v2428 = vadd.f32 %v2337, 1.0
        %v2429 = vadd.f32 %v2339, 1.0
        %v2430 = vadd.f32 %v2341, 1.0
        %v2431 = vadd.f32 %v2343, 1.0
        %v2432 = vadd.f32 %v2345, 1.0
        %v2433 = vadd.f32 %v2347, 1.0
        %v2434 = vadd.f32 %v2349, 1.0
        %v2435 = vadd.f32 %v2351, 1.0
        %v2436 = vadd.f32 %v2353, 1.0
        %v2437 = vadd.f32 %v2355, 1.0
        %v2438 = vadd.f32 %v2357, 1.0
        %v2439 = vadd.f32 %v2359, 1.0
        %v2440 = vadd.f32 %v2361, 1.0
        %v2441 = vadd.f32 %v2363, 1.0
        %v2442 = vadd.f32 %v2365, 1.0
        %v2443 = vadd.f32 %v2367, 1.0
        %v2444 = vadd.f32 %v2369, 1.0
        %v2445 = vadd.f32 %v2371, 1.0
        %v2446 = vadd.f32 %v2373, 1.0
        %v2447 = vadd.f32 %v2375, 1.0
        %v2448 = vadd.f32 %v2377, 1.0
        %v2449 = vadd.f32 %v2379, 1.0
        %v2450 = vadd.f32 %v2381, 1.0
        %v2451 = vadd.f32 %v2383, 1.0
        %v2452 = vadd.f32 %v2385, 1.0
        %v2453 = vadd.f32 %v2387, 1.0
        %v2454 = vadd.f32 %v2389, 1.0
        %v2455 = vadd.f32 %v2391, 1.0
        %v2456 = vrcp.pop %v2392
        %v2457 = vrcp.pop %v2393
        %v2458 = vrcp.pop %v2394
        %v2459 = vrcp.pop %v2395
        %v2460 = vrcp.pop %v2396
        %v2461 = vrcp.pop %v2397
        %v2462 = vrcp.pop %v2398
        %v2463 = vrcp.pop %v2399
        %v2464 = vrcp.pop %v2400
        %v2465 = vrcp.pop %v2401
        %v2466 = vrcp.pop %v2402
        %v2467 = vrcp.pop %v2403
        %v2468 = vrcp.pop %v2404
        %v2469 = vrcp.pop %v2405
        %v2470 = vrcp.pop %v2406
        %v2471 = vrcp.pop %v2407
        %v2472 = vrcp.pop %v2408
        %v2473 = vrcp.pop %v2409
        %v2474 = vrcp.pop %v2410
        %v2475 = vrcp.pop %v2411
        %v2476 = vrcp.pop %v2412
        %v2477 = vrcp.pop %v2413
        %v2478 = vrcp.pop %v2414
        %v2479 = vrcp.pop %v2415
        %v2480 = vrcp.pop %v2416
        %v2481 = vrcp.pop %v2417
        %v2482 = vrcp.pop %v2418
        %v2483 = vrcp.pop %v2419
        %v2484 = vrcp.pop %v2420
        %v2485 = vrcp.pop %v2421
        %v2486 = vrcp.pop %v2422
        %v2487 = vrcp.pop %v2423
        %v2488 = vrcp.pop %v2424
        %v2489 = vrcp.pop %v2425
        %v2490 = vrcp.pop %v2426
        %v2491 = vrcp.pop %v2427
        %v2492 = vrcp.pop %v2428
        %v2493 = vrcp.pop %v2429
        %v2494 = vrcp.pop %v2430
        %v2495 = vrcp.pop %v2431
        %v2496 = vrcp.pop %v2432
        %v2497 = vrcp.pop %v2433
        %v2498 = vrcp.pop %v2434
        %v2499 = vrcp.pop %v2435
        %v2500 = vrcp.pop %v2436
        %v2501 = vrcp.pop %v2437
        %v2502 = vrcp.pop %v2438
        %v2503 = vrcp.pop %v2439
        %v2504 = vrcp.pop %v2440
        %v2505 = vrcp.pop %v2441
        %v2506 = vrcp.pop %v2442
        %v2507 = vrcp.pop %v2443
        %v2508 = vrcp.pop %v2444
        %v2509 = vrcp.pop %v2445
        %v2510 = vrcp.pop %v2446
        %v2511 = vrcp.pop %v2447
        %v2512 = vrcp.pop %v2448
        %v2513 = vrcp.pop %v2449
        %v2514 = vrcp.pop %v2450
        %v2515 = vrcp.pop %v2451
        %v2516 = vrcp.pop %v2452
        %v2517 = vrcp.pop %v2453
        %v2518 = vrcp.pop %v2454
        %v2519 = vrcp.pop %v2455
        %v2520 = vpack.c.bf16 %v2458, %v2456
        %v2521 = vpack.c.bf16 %v2459, %v2457
        %v2522 = vpack.c.bf16 %v2462, %v2460
        %v2523 = vpack.c.bf16 %v2463, %v2461
        %v2524 = vpack.c.bf16 %v2466, %v2464
        %v2525 = vpack.c.bf16 %v2467, %v2465
        %v2526 = vpack.c.bf16 %v2470, %v2468
        %v2527 = vpack.c.bf16 %v2471, %v2469
        %v2528 = vpack.c.bf16 %v2474, %v2472
        %v2529 = vpack.c.bf16 %v2475, %v2473
        %v2530 = vpack.c.bf16 %v2478, %v2476
        %v2531 = vpack.c.bf16 %v2479, %v2477
        %v2532 = vpack.c.bf16 %v2482, %v2480
        %v2533 = vpack.c.bf16 %v2483, %v2481
        %v2534 = vpack.c.bf16 %v2486, %v2484
        %v2535 = vpack.c.bf16 %v2487, %v2485
        %v2536 = vpack.c.bf16 %v2490, %v2488
        %v2537 = vpack.c.bf16 %v2491, %v2489
        %v2538 = vpack.c.bf16 %v2494, %v2492
        %v2539 = vpack.c.bf16 %v2495, %v2493
        %v2540 = vpack.c.bf16 %v2498, %v2496
        %v2541 = vpack.c.bf16 %v2499, %v2497
        %v2542 = vpack.c.bf16 %v2502, %v2500
        %v2543 = vpack.c.bf16 %v2503, %v2501
        %v2544 = vpack.c.bf16 %v2506, %v2504
        %v2545 = vpack.c.bf16 %v2507, %v2505
        %v2546 = vpack.c.bf16 %v2510, %v2508
        %v2547 = vpack.c.bf16 %v2511, %v2509
        %v2548 = vpack.c.bf16 %v2514, %v2512
        %v2549 = vpack.c.bf16 %v2515, %v2513
        %v2550 = vpack.c.bf16 %v2518, %v2516
        %v2551 = vpack.c.bf16 %v2519, %v2517
        %v2552 = vld [vmem:[%s3] sm:$0xf]
        %v2553 = vld [vmem:[%s3 + $0x4] sm:$0xf]
        %v2554 = vld [vmem:[%s3 + $0x8] sm:$0xf]
        %v2555 = vld [vmem:[%s3 + $0xc] sm:$0xf]
        %v2556 = vld [vmem:[%s3 + $0x10] sm:$0xf]
        %v2557 = vld [vmem:[%s3 + $0x14] sm:$0xf]
        %v2558 = vld [vmem:[%s3 + $0x18] sm:$0xf]
        %v2559 = vld [vmem:[%s3 + $0x1c] sm:$0xf]
        %v2560 = vld [vmem:[%s3 + $0x20] sm:$0xf]
        %v2561 = vld [vmem:[%s3 + $0x24] sm:$0xf]
        %v2562 = vld [vmem:[%s3 + $0x28] sm:$0xf]
        %v2563 = vld [vmem:[%s3 + $0x2c] sm:$0xf]
        %v2564 = vld [vmem:[%s3 + $0x30] sm:$0xf]
        %v2565 = vld [vmem:[%s3 + $0x34] sm:$0xf]
        %v2566 = vld [vmem:[%s3 + $0x38] sm:$0xf]
        %v2567 = vld [vmem:[%s3 + $0x3c] sm:$0xf]
        %v2568 = vld [vmem:[%s3 + $0x40] sm:$0xf]
        %v2569 = vld [vmem:[%s3 + $0x44] sm:$0xf]
        %v2570 = vld [vmem:[%s3 + $0x48] sm:$0xf]
        %v2571 = vld [vmem:[%s3 + $0x4c] sm:$0xf]
        %v2572 = vld [vmem:[%s3 + $0x50] sm:$0xf]
        %v2573 = vld [vmem:[%s3 + $0x54] sm:$0xf]
        %v2574 = vld [vmem:[%s3 + $0x58] sm:$0xf]
        %v2575 = vld [vmem:[%s3 + $0x5c] sm:$0xf]
        %v2576 = vld [vmem:[%s3 + $0x60] sm:$0xf]
        %v2577 = vld [vmem:[%s3 + $0x64] sm:$0xf]
        %v2578 = vld [vmem:[%s3 + $0x68] sm:$0xf]
        %v2579 = vld [vmem:[%s3 + $0x6c] sm:$0xf]
        %v2580 = vld [vmem:[%s3 + $0x70] sm:$0xf]
        %v2581 = vld [vmem:[%s3 + $0x74] sm:$0xf]
        %v2582 = vld [vmem:[%s3 + $0x78] sm:$0xf]
        %v2583 = vld [vmem:[%s3 + $0x7c] sm:$0xf]
        %v2616 = vunpack.c.l.b16 %v2552
        %v2617 = vunpack.c.l.b16 %v2553
        %v2618 = vunpack.c.l.b16 %v2554
        %v2619 = vunpack.c.l.b16 %v2555
        %v2620 = vunpack.c.l.b16 %v2556
        %v2621 = vunpack.c.l.b16 %v2557
        %v2622 = vunpack.c.l.b16 %v2558
        %v2623 = vunpack.c.l.b16 %v2559
        %v2624 = vunpack.c.l.b16 %v2560
        %v2625 = vunpack.c.l.b16 %v2561
        %v2626 = vunpack.c.l.b16 %v2562
        %v2627 = vunpack.c.l.b16 %v2563
        %v2628 = vunpack.c.l.b16 %v2564
        %v2629 = vunpack.c.l.b16 %v2565
        %v2630 = vunpack.c.l.b16 %v2566
        %v2631 = vunpack.c.l.b16 %v2567
        %v2632 = vunpack.c.l.b16 %v2568
        %v2633 = vunpack.c.l.b16 %v2569
        %v2634 = vunpack.c.l.b16 %v2570
        %v2635 = vunpack.c.l.b16 %v2571
        %v2636 = vunpack.c.l.b16 %v2572
        %v2637 = vunpack.c.l.b16 %v2573
        %v2638 = vunpack.c.l.b16 %v2574
        %v2639 = vunpack.c.l.b16 %v2575
        %v2640 = vunpack.c.l.b16 %v2576
        %v2641 = vunpack.c.l.b16 %v2577
        %v2642 = vunpack.c.l.b16 %v2578
        %v2643 = vunpack.c.l.b16 %v2579
        %v2644 = vunpack.c.l.b16 %v2580
        %v2645 = vunpack.c.l.b16 %v2581
        %v2646 = vunpack.c.l.b16 %v2582
        %v2647 = vunpack.c.l.b16 %v2583
        %v2648 = vpack.c.b16 %v2617, %v2616
        %v2649 = vpack.c.b16 %v2619, %v2618
        %v2650 = vpack.c.b16 %v2621, %v2620
        %v2651 = vpack.c.b16 %v2623, %v2622
        %v2652 = vpack.c.b16 %v2625, %v2624
        %v2653 = vpack.c.b16 %v2627, %v2626
        %v2654 = vpack.c.b16 %v2629, %v2628
        %v2655 = vpack.c.b16 %v2631, %v2630
        %v2656 = vpack.c.b16 %v2633, %v2632
        %v2657 = vpack.c.b16 %v2635, %v2634
        %v2658 = vpack.c.b16 %v2637, %v2636
        %v2659 = vpack.c.b16 %v2639, %v2638
        %v2660 = vpack.c.b16 %v2641, %v2640
        %v2661 = vpack.c.b16 %v2643, %v2642
        %v2662 = vpack.c.b16 %v2645, %v2644
        %v2663 = vpack.c.b16 %v2647, %v2646
        %2680 = vmatprep.subr.bf16.mxu0 0
        %2681 = vmatpush1.bf16.msra.mxu0 %v2655
        %2682 = vmatprep.subr.bf16.mxu0 0
        %2683 = vmatpush1.bf16.msra.mxu0 %v2654
        %2684 = vmatprep.subr.bf16.mxu0 0
        %2685 = vmatpush1.bf16.msra.mxu0 %v2653
        %2686 = vmatprep.subr.bf16.mxu0 0
        %2687 = vmatpush1.bf16.msra.mxu0 %v2652
        %2688 = vmatprep.subr.bf16.mxu0 0
        %2689 = vmatpush1.bf16.msra.mxu0 %v2651
        %2690 = vmatprep.subr.bf16.mxu0 0
        %2691 = vmatpush1.bf16.msra.mxu0 %v2650
        %2692 = vmatprep.subr.bf16.mxu0 0
        %2693 = vmatpush1.bf16.msra.mxu0 %v2649
        %2694 = vmatprep.subr.bf16.mxu0 0
        %2695 = vmatpush1.bf16.msra.mxu0 %v2648
        %2696 = vmatprep.subr.bf16.mxu0 0
        %2697 = vmatpush2.bf16.msra.mxu0 %v2663
        %2698 = vmatprep.subr.bf16.mxu0 0
        %2699 = vmatpush2.bf16.msra.mxu0 %v2662
        %2700 = vmatprep.subr.bf16.mxu0 0
        %2701 = vmatpush2.bf16.msra.mxu0 %v2661
        %2702 = vmatprep.subr.bf16.mxu0 0
        %2703 = vmatpush2.bf16.msra.mxu0 %v2660
        %2704 = vmatprep.subr.bf16.mxu0 0
        %2705 = vmatpush2.bf16.msra.mxu0 %v2659
        %2706 = vmatprep.subr.bf16.mxu0 0
        %2707 = vmatpush2.bf16.msra.mxu0 %v2658
        %2708 = vmatprep.subr.bf16.mxu0 0
        %2709 = vmatpush2.bf16.msra.mxu0 %v2657
        %2710 = vmatprep.subr.bf16.mxu0 0
        %2711 = vmatpush2.bf16.msra.mxu0 %v2656
        %2712 = vmatprep.mubr.bf16.mxu0 %v2521
        %2713 = vmatmul.mubr.bf16.gmra.mxu0 %v2520
        %v2714 = vpop.f32.mrf.mxu0
        %v2715 = vadd.f32 0.0, %v2714
        %v2716 = vpop.f32.mrf.mxu0
        %v2717 = vpop.f32.mrf.mxu0
        %v2718 = vadd.f32 0.0, %v2717
        %v2719 = vpop.f32.mrf.mxu0
        %2720 = vmatprep.mubr.bf16.mxu0 %v2523
        %2721 = vmatmul.mubr.bf16.gmra.mxu0 %v2522
        %v2722 = vpop.f32.mrf.mxu0
        %v2723 = vadd.f32 0.0, %v2722
        %v2724 = vpop.f32.mrf.mxu0
        %v2725 = vpop.f32.mrf.mxu0
        %v2726 = vadd.f32 0.0, %v2725
        %v2727 = vpop.f32.mrf.mxu0
        %2728 = vmatprep.mubr.bf16.mxu0 %v2525
        %2729 = vmatmul.mubr.bf16.gmra.mxu0 %v2524
        %v2730 = vpop.f32.mrf.mxu0
        %v2731 = vadd.f32 0.0, %v2730
        %v2732 = vpop.f32.mrf.mxu0
        %v2733 = vpop.f32.mrf.mxu0
        %v2734 = vadd.f32 0.0, %v2733
        %v2735 = vpop.f32.mrf.mxu0
        %2736 = vmatprep.mubr.bf16.mxu0 %v2527
        %2737 = vmatmul.mubr.bf16.gmra.mxu0 %v2526
        %v2738 = vpop.f32.mrf.mxu0
        %v2739 = vadd.f32 0.0, %v2738
        %v2740 = vpop.f32.mrf.mxu0
        %v2741 = vpop.f32.mrf.mxu0
        %v2742 = vadd.f32 0.0, %v2741
        %v2743 = vpop.f32.mrf.mxu0
        %2744 = vmatprep.mubr.bf16.mxu0 %v2529
        %2745 = vmatmul.mubr.bf16.gmra.mxu0 %v2528
        %v2746 = vpop.f32.mrf.mxu0
        %v2747 = vadd.f32 0.0, %v2746
        %v2748 = vpop.f32.mrf.mxu0
        %v2749 = vpop.f32.mrf.mxu0
        %v2750 = vadd.f32 0.0, %v2749
        %v2751 = vpop.f32.mrf.mxu0
        %2752 = vmatprep.mubr.bf16.mxu0 %v2531
        %2753 = vmatmul.mubr.bf16.gmra.mxu0 %v2530
        %v2754 = vpop.f32.mrf.mxu0
        %v2755 = vadd.f32 0.0, %v2754
        %v2756 = vpop.f32.mrf.mxu0
        %v2757 = vpop.f32.mrf.mxu0
        %v2758 = vadd.f32 0.0, %v2757
        %v2759 = vpop.f32.mrf.mxu0
        %2760 = vmatprep.mubr.bf16.mxu0 %v2533
        %2761 = vmatmul.mubr.bf16.gmra.mxu0 %v2532
        %v2762 = vpop.f32.mrf.mxu0
        %v2763 = vadd.f32 0.0, %v2762
        %v2764 = vpop.f32.mrf.mxu0
        %v2765 = vpop.f32.mrf.mxu0
        %v2766 = vadd.f32 0.0, %v2765
        %v2767 = vpop.f32.mrf.mxu0
        %2768 = vmatprep.mubr.bf16.mxu0 %v2535
        %2769 = vmatmul.mubr.bf16.gmra.mxu0 %v2534
        %v2770 = vpop.f32.mrf.mxu0
        %v2771 = vadd.f32 0.0, %v2770
        %v2772 = vpop.f32.mrf.mxu0
        %v2773 = vpop.f32.mrf.mxu0
        %v2774 = vadd.f32 0.0, %v2773
        %v2775 = vpop.f32.mrf.mxu0
        %2776 = vmatprep.mubr.bf16.mxu0 %v2537
        %2777 = vmatmul.mubr.bf16.gmra.mxu0 %v2536
        %v2778 = vpop.f32.mrf.mxu0
        %v2779 = vadd.f32 0.0, %v2778
        %v2780 = vpop.f32.mrf.mxu0
        %v2781 = vpop.f32.mrf.mxu0
        %v2782 = vadd.f32 0.0, %v2781
        %v2783 = vpop.f32.mrf.mxu0
        %2784 = vmatprep.mubr.bf16.mxu0 %v2539
        %2785 = vmatmul.mubr.bf16.gmra.mxu0 %v2538
        %v2786 = vpop.f32.mrf.mxu0
        %v2787 = vadd.f32 0.0, %v2786
        %v2788 = vpop.f32.mrf.mxu0
        %v2789 = vpop.f32.mrf.mxu0
        %v2790 = vadd.f32 0.0, %v2789
        %v2791 = vpop.f32.mrf.mxu0
        %2792 = vmatprep.mubr.bf16.mxu0 %v2541
        %2793 = vmatmul.mubr.bf16.gmra.mxu0 %v2540
        %v2794 = vpop.f32.mrf.mxu0
        %v2795 = vadd.f32 0.0, %v2794
        %v2796 = vpop.f32.mrf.mxu0
        %v2797 = vpop.f32.mrf.mxu0
        %v2798 = vadd.f32 0.0, %v2797
        %v2799 = vpop.f32.mrf.mxu0
        %2800 = vmatprep.mubr.bf16.mxu0 %v2543
        %2801 = vmatmul.mubr.bf16.gmra.mxu0 %v2542
        %v2802 = vpop.f32.mrf.mxu0
        %v2803 = vadd.f32 0.0, %v2802
        %v2804 = vpop.f32.mrf.mxu0
        %v2805 = vpop.f32.mrf.mxu0
        %v2806 = vadd.f32 0.0, %v2805
        %v2807 = vpop.f32.mrf.mxu0
        %2808 = vmatprep.mubr.bf16.mxu0 %v2545
        %2809 = vmatmul.mubr.bf16.gmra.mxu0 %v2544
        %v2810 = vpop.f32.mrf.mxu0
        %v2811 = vadd.f32 0.0, %v2810
        %v2812 = vpop.f32.mrf.mxu0
        %v2813 = vpop.f32.mrf.mxu0
        %v2814 = vadd.f32 0.0, %v2813
        %v2815 = vpop.f32.mrf.mxu0
        %2816 = vmatprep.mubr.bf16.mxu0 %v2547
        %2817 = vmatmul.mubr.bf16.gmra.mxu0 %v2546
        %v2818 = vpop.f32.mrf.mxu0
        %v2819 = vadd.f32 0.0, %v2818
        %v2820 = vpop.f32.mrf.mxu0
        %v2821 = vpop.f32.mrf.mxu0
        %v2822 = vadd.f32 0.0, %v2821
        %v2823 = vpop.f32.mrf.mxu0
        %2824 = vmatprep.mubr.bf16.mxu0 %v2549
        %2825 = vmatmul.mubr.bf16.gmra.mxu0 %v2548
        %v2826 = vpop.f32.mrf.mxu0
        %v2827 = vadd.f32 0.0, %v2826
        %v2828 = vpop.f32.mrf.mxu0
        %v2829 = vpop.f32.mrf.mxu0
        %v2830 = vadd.f32 0.0, %v2829
        %v2831 = vpop.f32.mrf.mxu0
        %2832 = vmatprep.mubr.bf16.mxu0 %v2551
        %2833 = vmatmul.mubr.bf16.gmra.mxu0 %v2550
        %v2834 = vpop.f32.mrf.mxu0
        %v2835 = vadd.f32 0.0, %v2834
        %v2836 = vpop.f32.mrf.mxu0
        %v2837 = vpop.f32.mrf.mxu0
        %v2838 = vadd.f32 0.0, %v2837
        %v2839 = vpop.f32.mrf.mxu0
        %2840 = vdwg.mxu0
        %v2841 = vld [vmem:[#allocation2] sm:$0x1]
        %v2843 = vlaneseq
        %v2844 = vshrl.u32 %v2843, 7
        %v2845 = vsub.s32 0, %v2844
        %v2846 = vrot.slane %v2841, %v2845
        %v2848 = vadd.f32 %v2715, %v2846
        %v2849 = vadd.f32 %v2718, %v2846
        %v2850 = vadd.f32 %v2723, %v2846
        %v2851 = vadd.f32 %v2726, %v2846
        %v2852 = vadd.f32 %v2731, %v2846
        %v2853 = vadd.f32 %v2734, %v2846
        %v2854 = vadd.f32 %v2739, %v2846
        %v2855 = vadd.f32 %v2742, %v2846
        %v2856 = vadd.f32 %v2747, %v2846
        %v2857 = vadd.f32 %v2750, %v2846
        %v2858 = vadd.f32 %v2755, %v2846
        %v2859 = vadd.f32 %v2758, %v2846
        %v2860 = vadd.f32 %v2763, %v2846
        %v2861 = vadd.f32 %v2766, %v2846
        %v2862 = vadd.f32 %v2771, %v2846
        %v2863 = vadd.f32 %v2774, %v2846
        %v2864 = vadd.f32 %v2779, %v2846
        %v2865 = vadd.f32 %v2782, %v2846
        %v2866 = vadd.f32 %v2787, %v2846
        %v2867 = vadd.f32 %v2790, %v2846
        %v2868 = vadd.f32 %v2795, %v2846
        %v2869 = vadd.f32 %v2798, %v2846
        %v2870 = vadd.f32 %v2803, %v2846
        %v2871 = vadd.f32 %v2806, %v2846
        %v2872 = vadd.f32 %v2811, %v2846
        %v2873 = vadd.f32 %v2814, %v2846
        %v2874 = vadd.f32 %v2819, %v2846
        %v2875 = vadd.f32 %v2822, %v2846
        %v2876 = vadd.f32 %v2827, %v2846
        %v2877 = vadd.f32 %v2830, %v2846
        %v2878 = vadd.f32 %v2835, %v2846
        %v2879 = vadd.f32 %v2838, %v2846
        %v2880 = vsub.f32 0.0, %v2848
        %v2881 = vsub.f32 0.0, %v2849
        %v2882 = vsub.f32 0.0, %v2850
        %v2883 = vsub.f32 0.0, %v2851
        %v2884 = vsub.f32 0.0, %v2852
        %v2885 = vsub.f32 0.0, %v2853
        %v2886 = vsub.f32 0.0, %v2854
        %v2887 = vsub.f32 0.0, %v2855
        %v2888 = vsub.f32 0.0, %v2856
        %v2889 = vsub.f32 0.0, %v2857
        %v2890 = vsub.f32 0.0, %v2858
        %v2891 = vsub.f32 0.0, %v2859
        %v2892 = vsub.f32 0.0, %v2860
        %v2893 = vsub.f32 0.0, %v2861
        %v2894 = vsub.f32 0.0, %v2862
        %v2895 = vsub.f32 0.0, %v2863
        %v2896 = vsub.f32 0.0, %v2864
        %v2897 = vsub.f32 0.0, %v2865
        %v2898 = vsub.f32 0.0, %v2866
        %v2899 = vsub.f32 0.0, %v2867
        %v2900 = vsub.f32 0.0, %v2868
        %v2901 = vsub.f32 0.0, %v2869
        %v2902 = vsub.f32 0.0, %v2870
        %v2903 = vsub.f32 0.0, %v2871
        %v2904 = vsub.f32 0.0, %v2872
        %v2905 = vsub.f32 0.0, %v2873
        %v2906 = vsub.f32 0.0, %v2874
        %v2907 = vsub.f32 0.0, %v2875
        %v2908 = vsub.f32 0.0, %v2876
        %v2909 = vsub.f32 0.0, %v2877
        %v2910 = vsub.f32 0.0, %v2878
        %v2911 = vsub.f32 0.0, %v2879
        %v2912 = vmul.f32 %v2880, 1.442695
        %v2913 = vpow.pop %v2912
        %v2914 = vmul.f32 %v2881, 1.442695
        %v2915 = vpow.pop %v2914
        %v2916 = vmul.f32 %v2882, 1.442695
        %v2917 = vpow.pop %v2916
        %v2918 = vmul.f32 %v2883, 1.442695
        %v2919 = vpow.pop %v2918
        %v2920 = vmul.f32 %v2884, 1.442695
        %v2921 = vpow.pop %v2920
        %v2922 = vmul.f32 %v2885, 1.442695
        %v2923 = vpow.pop %v2922
        %v2924 = vmul.f32 %v2886, 1.442695
        %v2925 = vpow.pop %v2924
        %v2926 = vmul.f32 %v2887, 1.442695
        %v2927 = vpow.pop %v2926
        %v2928 = vmul.f32 %v2888, 1.442695
        %v2929 = vpow.pop %v2928
        %v2930 = vmul.f32 %v2889, 1.442695
        %v2931 = vpow.pop %v2930
        %v2932 = vmul.f32 %v2890, 1.442695
        %v2933 = vpow.pop %v2932
        %v2934 = vmul.f32 %v2891, 1.442695
        %v2935 = vpow.pop %v2934
        %v2936 = vmul.f32 %v2892, 1.442695
        %v2937 = vpow.pop %v2936
        %v2938 = vmul.f32 %v2893, 1.442695
        %v2939 = vpow.pop %v2938
        %v2940 = vmul.f32 %v2894, 1.442695
        %v2941 = vpow.pop %v2940
        %v2942 = vmul.f32 %v2895, 1.442695
        %v2943 = vpow.pop %v2942
        %v2944 = vmul.f32 %v2896, 1.442695
        %v2945 = vpow.pop %v2944
        %v2946 = vmul.f32 %v2897, 1.442695
        %v2947 = vpow.pop %v2946
        %v2948 = vmul.f32 %v2898, 1.442695
        %v2949 = vpow.pop %v2948
        %v2950 = vmul.f32 %v2899, 1.442695
        %v2951 = vpow.pop %v2950
        %v2952 = vmul.f32 %v2900, 1.442695
        %v2953 = vpow.pop %v2952
        %v2954 = vmul.f32 %v2901, 1.442695
        %v2955 = vpow.pop %v2954
        %v2956 = vmul.f32 %v2902, 1.442695
        %v2957 = vpow.pop %v2956
        %v2958 = vmul.f32 %v2903, 1.442695
        %v2959 = vpow.pop %v2958
        %v2960 = vmul.f32 %v2904, 1.442695
        %v2961 = vpow.pop %v2960
        %v2962 = vmul.f32 %v2905, 1.442695
        %v2963 = vpow.pop %v2962
        %v2964 = vmul.f32 %v2906, 1.442695
        %v2965 = vpow.pop %v2964
        %v2966 = vmul.f32 %v2907, 1.442695
        %v2967 = vpow.pop %v2966
        %v2968 = vmul.f32 %v2908, 1.442695
        %v2969 = vpow.pop %v2968
        %v2970 = vmul.f32 %v2909, 1.442695
        %v2971 = vpow.pop %v2970
        %v2972 = vmul.f32 %v2910, 1.442695
        %v2973 = vpow.pop %v2972
        %v2974 = vmul.f32 %v2911, 1.442695
        %v2975 = vpow.pop %v2974
        %v2976 = vadd.f32 %v2913, 1.0
        %v2977 = vadd.f32 %v2915, 1.0
        %v2978 = vadd.f32 %v2917, 1.0
        %v2979 = vadd.f32 %v2919, 1.0
        %v2980 = vadd.f32 %v2921, 1.0
        %v2981 = vadd.f32 %v2923, 1.0
        %v2982 = vadd.f32 %v2925, 1.0
        %v2983 = vadd.f32 %v2927, 1.0
        %v2984 = vadd.f32 %v2929, 1.0
        %v2985 = vadd.f32 %v2931, 1.0
        %v2986 = vadd.f32 %v2933, 1.0
        %v2987 = vadd.f32 %v2935, 1.0
        %v2988 = vadd.f32 %v2937, 1.0
        %v2989 = vadd.f32 %v2939, 1.0
        %v2990 = vadd.f32 %v2941, 1.0
        %v2991 = vadd.f32 %v2943, 1.0
        %v2992 = vadd.f32 %v2945, 1.0
        %v2993 = vadd.f32 %v2947, 1.0
        %v2994 = vadd.f32 %v2949, 1.0
        %v2995 = vadd.f32 %v2951, 1.0
        %v2996 = vadd.f32 %v2953, 1.0
        %v2997 = vadd.f32 %v2955, 1.0
        %v2998 = vadd.f32 %v2957, 1.0
        %v2999 = vadd.f32 %v2959, 1.0
        %v3000 = vadd.f32 %v2961, 1.0
        %v3001 = vadd.f32 %v2963, 1.0
        %v3002 = vadd.f32 %v2965, 1.0
        %v3003 = vadd.f32 %v2967, 1.0
        %v3004 = vadd.f32 %v2969, 1.0
        %v3005 = vadd.f32 %v2971, 1.0
        %v3006 = vadd.f32 %v2973, 1.0
        %v3007 = vadd.f32 %v2975, 1.0
        %v3008 = vrcp.pop %v2976
        %v3009 = vrcp.pop %v2977
        %v3010 = vrcp.pop %v2978
        %v3011 = vrcp.pop %v2979
        %v3012 = vrcp.pop %v2980
        %v3013 = vrcp.pop %v2981
        %v3014 = vrcp.pop %v2982
        %v3015 = vrcp.pop %v2983
        %v3016 = vrcp.pop %v2984
        %v3017 = vrcp.pop %v2985
        %v3018 = vrcp.pop %v2986
        %v3019 = vrcp.pop %v2987
        %v3020 = vrcp.pop %v2988
        %v3021 = vrcp.pop %v2989
        %v3022 = vrcp.pop %v2990
        %v3023 = vrcp.pop %v2991
        %v3024 = vrcp.pop %v2992
        %v3025 = vrcp.pop %v2993
        %v3026 = vrcp.pop %v2994
        %v3027 = vrcp.pop %v2995
        %v3028 = vrcp.pop %v2996
        %v3029 = vrcp.pop %v2997
        %v3030 = vrcp.pop %v2998
        %v3031 = vrcp.pop %v2999
        %v3032 = vrcp.pop %v3000
        %v3033 = vrcp.pop %v3001
        %v3034 = vrcp.pop %v3002
        %v3035 = vrcp.pop %v3003
        %v3036 = vrcp.pop %v3004
        %v3037 = vrcp.pop %v3005
        %v3038 = vrcp.pop %v3006
        %v3039 = vrcp.pop %v3007
        %vm3040 = vcmask 7168
        %3041 = vst.msk [vmem:[%s261] sm:$0xff] %vm3040, %v3008
        %3042 = vst.msk [vmem:[%s261 + $0x8] sm:$0xff] %vm3040, %v3009
        %3043 = vst.msk [vmem:[%s261 + $0x10] sm:$0xff] %vm3040, %v3010
        %3044 = vst.msk [vmem:[%s261 + $0x18] sm:$0xff] %vm3040, %v3011
        %3045 = vst.msk [vmem:[%s261 + $0x20] sm:$0xff] %vm3040, %v3012
        %3046 = vst.msk [vmem:[%s261 + $0x28] sm:$0xff] %vm3040, %v3013
        %3047 = vst.msk [vmem:[%s261 + $0x30] sm:$0xff] %vm3040, %v3014
        %3048 = vst.msk [vmem:[%s261 + $0x38] sm:$0xff] %vm3040, %v3015
        %3049 = vst.msk [vmem:[%s261 + $0x40] sm:$0xff] %vm3040, %v3016
        %3050 = vst.msk [vmem:[%s261 + $0x48] sm:$0xff] %vm3040, %v3017
        %3051 = vst.msk [vmem:[%s261 + $0x50] sm:$0xff] %vm3040, %v3018
        %3052 = vst.msk [vmem:[%s261 + $0x58] sm:$0xff] %vm3040, %v3019
        %3053 = vst.msk [vmem:[%s261 + $0x60] sm:$0xff] %vm3040, %v3020
        %3054 = vst.msk [vmem:[%s261 + $0x68] sm:$0xff] %vm3040, %v3021
        %3055 = vst.msk [vmem:[%s261 + $0x70] sm:$0xff] %vm3040, %v3022
        %3056 = vst.msk [vmem:[%s261 + $0x78] sm:$0xff] %vm3040, %v3023
        %3057 = vst.msk [vmem:[%s261 + $0x80] sm:$0xff] %vm3040, %v3024
        %3058 = vst.msk [vmem:[%s261 + $0x88] sm:$0xff] %vm3040, %v3025
        %3059 = vst.msk [vmem:[%s261 + $0x90] sm:$0xff] %vm3040, %v3026
        %3060 = vst.msk [vmem:[%s261 + $0x98] sm:$0xff] %vm3040, %v3027
        %3061 = vst.msk [vmem:[%s261 + $0xa0] sm:$0xff] %vm3040, %v3028
        %3062 = vst.msk [vmem:[%s261 + $0xa8] sm:$0xff] %vm3040, %v3029
        %3063 = vst.msk [vmem:[%s261 + $0xb0] sm:$0xff] %vm3040, %v3030
        %3064 = vst.msk [vmem:[%s261 + $0xb8] sm:$0xff] %vm3040, %v3031
        %3065 = vst.msk [vmem:[%s261 + $0xc0] sm:$0xff] %vm3040, %v3032
        %3066 = vst.msk [vmem:[%s261 + $0xc8] sm:$0xff] %vm3040, %v3033
        %3067 = vst.msk [vmem:[%s261 + $0xd0] sm:$0xff] %vm3040, %v3034
        %3068 = vst.msk [vmem:[%s261 + $0xd8] sm:$0xff] %vm3040, %v3035
        %3069 = vst.msk [vmem:[%s261 + $0xe0] sm:$0xff] %vm3040, %v3036
        %3070 = vst.msk [vmem:[%s261 + $0xe8] sm:$0xff] %vm3040, %v3037
        %3071 = vst.msk [vmem:[%s261 + $0xf0] sm:$0xff] %vm3040, %v3038
        %3072 = vst.msk [vmem:[%s261 + $0xf8] sm:$0xff] %vm3040, %v3039
        %s3073 = smul.u32 32, %s22
        %p3074 = scmp.lt.s32.totalorder %s3073, 63
        %s3075 = scalar_select %p3074, %s3073, 63
        %s3076 = smul.addr %s3075, 8
        %s3077 = scalar_lea.vmem %s5, %s3076
        // Predicated region
        $region49: #{network_forward.1} parent=39 // pred_check
          %p3078 = pneg %p150
        $region50: #{network_forward.1} parent=39 // pred_check_branch
          %3080 = sbr.rel (%p3078) target = $region52
        $region51: #{network_forward.1} parent=39 // pred_region
          %s3081 = smul.u32 32, %s22
        $region52: #{network_forward.1} parent=39 // pred_fallthru
          _
      $region40: #{network_forward.1} parent=5 // pred_fallthru
        _
      %p3082 = scmp.le.s32.totalorder 2, %s17
      // Predicated region
      $region53: #{network_forward.1} parent=5 // pred_check
        %p3083 = pneg %p3082
      $region54: #{network_forward.1} parent=5 // pred_check_branch
        %3085 = sbr.rel (%p3083) target = $region56
      $region55: #{network_forward.1} parent=5 // pred_region
        %s3086 = ssub.s32 %s17, 2
        // Predicated region
        $region57: #{network_forward.1} parent=55 // pred_check
          %p3087 = pneg %p156
        $region58: #{network_forward.1} parent=55 // pred_check_branch
          %3089 = sbr.rel (%p3087) target = $region60
        $region59: #{network_forward.1} parent=55 // pred_region
          %s3090 = smul.u32 32, %s23
          %p3091 = scmp.lt.s32.totalorder %s3090, 63
          %s3092 = scalar_select %p3091, %s3090, 63
          %s3093 = smul.addr %s3092, 8
          %s3094 = scalar_lea.vmem %s5, %s3093
        $region60: #{network_forward.1} parent=55 // pred_fallthru
          _
      $region56: #{network_forward.1} parent=5 // pred_fallthru
        _
    $region6: #{network_forward.1} parent=1 // loop_footer
      %s21 = sadd.s32 1, %s17
    $region7: #{network_forward.1} parent=1 // loop_footer_branch
      %16 = sbr.rel target = $region3
    $region8: #{network_forward.1} parent=1 // loop_exit
      _
    %3095 = vsyncpa [#allocation4], 1
    %s3096 = scalar_lea.sflag [#allocation4], 1
    %3097 = vsyncpa %s3096, 1
    %3098 = vsyncpa [#allocation6], 1

</llo_original>
